<compile_context>
chip_gen: v7x
topology: tpu7x:2x2x1
jax: 0.10.0
libtpu: 0.0.40
codegen_flags: <defaults>
</compile_context>

<pallas_src>
import jax
import jax.numpy as jnp
from jax.experimental import pallas as pl
from jax.experimental.pallas import tpu as pltpu


def _round_up(x, m):
    return (x + m - 1) // m * m


def _make_rnn_kernel(num_layers: int, seq_len: int, batch: int, hidden: int,
                     in_dims: tuple):
    """Kernel for a `num_layers`-deep tanh RNN + output Linear.

    Kernel args: x_ref (T*B, I) time-major, per-layer packed weights,
    packed output layer, out_ref (B, O).

    Packed layer layout (rows):
        [0, in_dim)              -> W_ih^T        (in_dim, H)
        [in_p, in_p + H)         -> W_hh^T        (H, H)
        [in_p + h_pad]           -> b_ih + b_hh   (1, H)
    Packed output layout (rows):
        [0, H)                   -> W_out^T       (H, O)
        [h_pad]                  -> b_out         (1, O)
    """
    h_pad = _round_up(hidden, 8)

    def kernel(x_ref, *args):
        layer_packs = args[:num_layers]
        out_pack_ref = args[num_layers]
        out_ref = args[num_layers + 1]

        # Layer-0 input slab, time-major (row t*B + b  <->  x[b, t, :]).
        src = x_ref[...].astype(jnp.float32)               # (T*B, I) value

        h = jnp.zeros((batch, hidden), jnp.float32)
        for l in range(num_layers):
            in_dim = in_dims[l]
            in_p = _round_up(in_dim, 8)
            pack = layer_packs[l]
            w_ih = pack[0:in_dim, :]                       # (in_dim, H)
            w_hh = pack[in_p:in_p + hidden, :]             # (H, H)
            bias = pack[in_p + h_pad:in_p + h_pad + 1, :]  # (1, H) = b_ih+b_hh

            # Hoisted input projection: ONE MXU GEMM over all timesteps plus a
            # single bias broadcast.  `xp` stays register-resident, so the
            # serial recurrence below pays only MXU (h @ W_hh^T) + VPU add +
            # EUP tanh per step -- no VMEM store->load on the critical path.
            xp = jnp.dot(src, w_ih, preferred_element_type=jnp.float32) + bias

            is_last = (l == num_layers - 1)
            h = jnp.zeros((batch, hidden), jnp.float32)
            hs = []
            # Fully unrolled recurrence (seq_len is a small static int).
            # For large T: lax.fori_loop(..., unroll=k) + aligned VMEM scratch.
            for t in range(seq_len):
                r0 = t * batch
                h = jnp.tanh(
                    xp[r0:r0 + batch, :]
                    + jnp.dot(h, w_hh, preferred_element_type=jnp.float32)
                )
                if not is_last:
                    hs.append(h)

            if not is_last:
                # Next layer's input, still register-resident (time-major:
                # row t*B + b == h_t[b]).  No scratch ping-pong needed here.
                src = jnp.concatenate(hs, axis=0)          # (T*B, H)

        w_out = out_pack_ref[0:hidden, :]                  # (H, O)
        b_out = out_pack_ref[h_pad:h_pad + 1, :]           # (1, O)
        out_ref[...] = (
            jnp.dot(h, w_out, preferred_element_type=jnp.float32) + b_out
        ).astype(out_ref.dtype)

    return kernel


def pack_params(params, *, hidden_size, param_dtype=jnp.float32):
    """One-time (model-load) packing of weights into 8-row-aligned VMEM slabs."""
    H = hidden_size
    h_pad = _round_up(H, 8)
    packs = []
    in_dims = []
    for (w_ih, w_hh, b_ih, b_hh) in params["layers"]:
        in_dim = w_ih.shape[1]
        in_dims.append(in_dim)
        in_p = _round_up(in_dim, 8)
        pack = jnp.zeros((in_p + h_pad + 1, H), param_dtype)
        pack = pack.at[0:in_dim, :].set(w_ih.T.astype(param_dtype))
        pack = pack.at[in_p:in_p + H, :].set(w_hh.T.astype(param_dtype))
        pack = pack.at[in_p + h_pad, :].set((b_ih + b_hh).astype(param_dtype))
        packs.append(pack)
    O = params["w_out"].shape[0]
    out_pack = jnp.zeros((h_pad + 1, O), param_dtype)
    out_pack = out_pack.at[0:H, :].set(params["w_out"].T.astype(param_dtype))
    out_pack = out_pack.at[h_pad, :].set(params["b_out"].astype(param_dtype))
    return {
        "packs": tuple(packs),
        "out_pack": out_pack,
        "in_dims": tuple(in_dims),
        "hidden": H,
        "output": O,
        "num_layers": len(packs),
    }


def rnn_model_forward(x, packed):
    """x: (B, T, input_size) float32 (batch_first, like PyTorch).

    Returns (B, output_size) float32.
    """
    B, T, I = x.shape
    H = packed["hidden"]
    O = packed["output"]
    num_layers = packed["num_layers"]

    # Dense time-major 2D slab: row t*B + b  <->  x[b, t, :].
    # Negligible at these shapes; at scale fold into the kernel's input DMA.
    x_tm = jnp.transpose(x, (1, 0, 2)).reshape(T * B, I).astype(jnp.float32)

    kernel = _make_rnn_kernel(num_layers, T, B, H, packed["in_dims"])
    vmem = pl.BlockSpec(memory_space=pltpu.MemorySpace.VMEM)

    return pl.pallas_call(
        kernel,
        out_shape=jax.ShapeDtypeStruct((B, O), jnp.float32),
        in_specs=[vmem] * (num_layers + 2),
        out_specs=vmem,
        compiler_params=pltpu.CompilerParams(vmem_limit_bytes=32 * 1024 * 1024),
    )(x_tm, *packed["packs"], packed["out_pack"])


def init_params(key, input_size, hidden_size, num_layers, output_size):
    """Deterministic init mirroring PyTorch's default uniform(-1/sqrt(H), 1/sqrt(H))."""
    bound = 1.0 / jnp.sqrt(jnp.float32(hidden_size))
    layers = []
    for l in range(num_layers):
        in_dim = input_size if l == 0 else hidden_size
        key, k1, k2, k3, k4 = jax.random.split(key, 5)
        w_ih = jax.random.uniform(k1, (hidden_size, in_dim), jnp.float32, -bound, bound)
        w_hh = jax.random.uniform(k2, (hidden_size, hidden_size), jnp.float32, -bound, bound)
        b_ih = jax.random.uniform(k3, (hidden_size,), jnp.float32, -bound, bound)
        b_hh = jax.random.uniform(k4, (hidden_size,), jnp.float32, -bound, bound)
        layers.append((w_ih, w_hh, b_ih, b_hh))
    key, k1, k2 = jax.random.split(key, 3)
    w_out = jax.random.uniform(k1, (output_size, hidden_size), jnp.float32, -bound, bound)
    b_out = jax.random.uniform(k2, (output_size,), jnp.float32, -bound, bound)
    return {"layers": layers, "w_out": w_out, "b_out": b_out}


def reference_forward(x, params):
    """Pure-JAX reference of the PyTorch forward (eval mode, dropout off)."""
    B, T, _ = x.shape
    src = x
    for (w_ih, w_hh, b_ih, b_hh) in params["layers"]:
        H = w_hh.shape[0]
        h = jnp.zeros((B, H), jnp.float32)
        outs = []
        for t in range(T):
            h = jnp.tanh(src[:, t, :] @ w_ih.T + b_ih + h @ w_hh.T + b_hh)
            outs.append(h)
        src = jnp.stack(outs, axis=1)
    return src[:, -1] @ params["w_out"].T + params["b_out"]


if __name__ == "__main__":
    # Small shapes consistent with the module: batch=2, seq=8, input=16, hidden=32
    B, T = 2, 8
    input_size, hidden_size, num_layers, output_size = 16, 32, 2, 4
    dropout_prob = 0.1  # nn.RNN dropout is train-only; identity in this inference forward

    key = jax.random.PRNGKey(0)
    key, kx = jax.random.split(key)
    x = jax.random.normal(kx, (B, T, input_size), jnp.float32)

    params = init_params(key, input_size, hidden_size, num_layers, output_size)
    packed = pack_params(params, hidden_size=hidden_size)   # one-time packing

    out = rnn_model_forward(x, packed)
    out = jax.block_until_ready(out)

    ref = reference_forward(x, params)
    assert out.shape == (B, output_size)
    assert jnp.allclose(out, ref, atol=1e-5, rtol=1e-5), (out, ref)

    print("KERNEL_OK")
</pallas_src>

<mosaic_0001>
module attributes {stable_mosaic.version = 11 : i64} {
  func.func @kernel(%arg0: memref<16x16xf32, #tpu.memory_space<vmem>>, %arg1: memref<49x32xf32, #tpu.memory_space<vmem>>, %arg2: memref<65x32xf32, #tpu.memory_space<vmem>>, %arg3: memref<33x4xf32, #tpu.memory_space<vmem>>, %arg4: memref<2x4xf32, #tpu.memory_space<vmem>>) attributes {dimension_semantics = [], scalar_prefetch = 0 : i64, scratch_operands = 0 : i64, tpu.core_type = #tpu.core_type<tc>} {
    %c0 = arith.constant 0 : index
    %c0_0 = arith.constant 0 : index
    %0 = vector.load %arg0[%c0, %c0_0] : memref<16x16xf32, #tpu.memory_space<vmem>>, vector<16x16xf32>
    %c0_1 = arith.constant 0 : index
    %c0_2 = arith.constant 0 : index
    %1 = vector.load %arg1[%c0_1, %c0_2] : memref<49x32xf32, #tpu.memory_space<vmem>>, vector<16x32xf32>
    %c16 = arith.constant 16 : index
    %c0_3 = arith.constant 0 : index
    %2 = vector.load %arg1[%c16, %c0_3] : memref<49x32xf32, #tpu.memory_space<vmem>>, vector<32x32xf32>
    %c48 = arith.constant 48 : index
    %c0_4 = arith.constant 0 : index
    %3 = vector.load %arg1[%c48, %c0_4] : memref<49x32xf32, #tpu.memory_space<vmem>>, vector<1x32xf32>
    %cst = arith.constant dense<0.000000e+00> : vector<16x32xf32>
    %4 = tpu.matmul %0, %1, %cst {dimension_numbers = #tpu.dot_dimension_numbers<[1], [0], [0], [1], [0, 0, 1, 1], [], []>} : vector<16x16xf32>, vector<16x32xf32>, vector<16x32xf32> -> vector<16x32xf32>
    %5 = vector.broadcast %3 : vector<1x32xf32> to vector<16x32xf32>
    %6 = arith.addf %4, %5 : vector<16x32xf32>
    %cst_5 = arith.constant 0.000000e+00 : f32
    %7 = vector.broadcast %cst_5 : f32 to vector<2x32xf32>
    %8 = vector.extract_strided_slice %6 {offsets = [0, 0], sizes = [2, 32], strides = [1, 1]} : vector<16x32xf32> to vector<2x32xf32>
    %cst_6 = arith.constant dense<0.000000e+00> : vector<2x32xf32>
    %9 = tpu.matmul %7, %2, %cst_6 {dimension_numbers = #tpu.dot_dimension_numbers<[1], [0], [0], [1], [0, 0, 1, 1], [], []>} : vector<2x32xf32>, vector<32x32xf32>, vector<2x32xf32> -> vector<2x32xf32>
    %10 = arith.addf %8, %9 : vector<2x32xf32>
    %11 = math.tanh %10 : vector<2x32xf32>
    %12 = vector.extract_strided_slice %6 {offsets = [2, 0], sizes = [2, 32], strides = [1, 1]} : vector<16x32xf32> to vector<2x32xf32>
    %cst_7 = arith.constant dense<0.000000e+00> : vector<2x32xf32>
    %13 = tpu.matmul %11, %2, %cst_7 {dimension_numbers = #tpu.dot_dimension_numbers<[1], [0], [0], [1], [0, 0, 1, 1], [], []>} : vector<2x32xf32>, vector<32x32xf32>, vector<2x32xf32> -> vector<2x32xf32>
    %14 = arith.addf %12, %13 : vector<2x32xf32>
    %15 = math.tanh %14 : vector<2x32xf32>
    %16 = vector.extract_strided_slice %6 {offsets = [4, 0], sizes = [2, 32], strides = [1, 1]} : vector<16x32xf32> to vector<2x32xf32>
    %cst_8 = arith.constant dense<0.000000e+00> : vector<2x32xf32>
    %17 = tpu.matmul %15, %2, %cst_8 {dimension_numbers = #tpu.dot_dimension_numbers<[1], [0], [0], [1], [0, 0, 1, 1], [], []>} : vector<2x32xf32>, vector<32x32xf32>, vector<2x32xf32> -> vector<2x32xf32>
    %18 = arith.addf %16, %17 : vector<2x32xf32>
    %19 = math.tanh %18 : vector<2x32xf32>
    %20 = vector.extract_strided_slice %6 {offsets = [6, 0], sizes = [2, 32], strides = [1, 1]} : vector<16x32xf32> to vector<2x32xf32>
    %cst_9 = arith.constant dense<0.000000e+00> : vector<2x32xf32>
    %21 = tpu.matmul %19, %2, %cst_9 {dimension_numbers = #tpu.dot_dimension_numbers<[1], [0], [0], [1], [0, 0, 1, 1], [], []>} : vector<2x32xf32>, vector<32x32xf32>, vector<2x32xf32> -> vector<2x32xf32>
    %22 = arith.addf %20, %21 : vector<2x32xf32>
    %23 = math.tanh %22 : vector<2x32xf32>
    %24 = vector.extract_strided_slice %6 {offsets = [8, 0], sizes = [2, 32], strides = [1, 1]} : vector<16x32xf32> to vector<2x32xf32>
    %cst_10 = arith.constant dense<0.000000e+00> : vector<2x32xf32>
    %25 = tpu.matmul %23, %2, %cst_10 {dimension_numbers = #tpu.dot_dimension_numbers<[1], [0], [0], [1], [0, 0, 1, 1], [], []>} : vector<2x32xf32>, vector<32x32xf32>, vector<2x32xf32> -> vector<2x32xf32>
    %26 = arith.addf %24, %25 : vector<2x32xf32>
    %27 = math.tanh %26 : vector<2x32xf32>
    %28 = vector.extract_strided_slice %6 {offsets = [10, 0], sizes = [2, 32], strides = [1, 1]} : vector<16x32xf32> to vector<2x32xf32>
    %cst_11 = arith.constant dense<0.000000e+00> : vector<2x32xf32>
    %29 = tpu.matmul %27, %2, %cst_11 {dimension_numbers = #tpu.dot_dimension_numbers<[1], [0], [0], [1], [0, 0, 1, 1], [], []>} : vector<2x32xf32>, vector<32x32xf32>, vector<2x32xf32> -> vector<2x32xf32>
    %30 = arith.addf %28, %29 : vector<2x32xf32>
    %31 = math.tanh %30 : vector<2x32xf32>
    %32 = vector.extract_strided_slice %6 {offsets = [12, 0], sizes = [2, 32], strides = [1, 1]} : vector<16x32xf32> to vector<2x32xf32>
    %cst_12 = arith.constant dense<0.000000e+00> : vector<2x32xf32>
    %33 = tpu.matmul %31, %2, %cst_12 {dimension_numbers = #tpu.dot_dimension_numbers<[1], [0], [0], [1], [0, 0, 1, 1], [], []>} : vector<2x32xf32>, vector<32x32xf32>, vector<2x32xf32> -> vector<2x32xf32>
    %34 = arith.addf %32, %33 : vector<2x32xf32>
    %35 = math.tanh %34 : vector<2x32xf32>
    %36 = vector.extract_strided_slice %6 {offsets = [14, 0], sizes = [2, 32], strides = [1, 1]} : vector<16x32xf32> to vector<2x32xf32>
    %cst_13 = arith.constant dense<0.000000e+00> : vector<2x32xf32>
    %37 = tpu.matmul %35, %2, %cst_13 {dimension_numbers = #tpu.dot_dimension_numbers<[1], [0], [0], [1], [0, 0, 1, 1], [], []>} : vector<2x32xf32>, vector<32x32xf32>, vector<2x32xf32> -> vector<2x32xf32>
    %38 = arith.addf %36, %37 : vector<2x32xf32>
    %39 = math.tanh %38 : vector<2x32xf32>
    %40 = tpu.concatenate %11, %15, %19, %23, %27, %31, %35, %39 in 0 : vector<2x32xf32>, vector<2x32xf32>, vector<2x32xf32>, vector<2x32xf32>, vector<2x32xf32>, vector<2x32xf32>, vector<2x32xf32>, vector<2x32xf32> -> vector<16x32xf32>
    %c0_14 = arith.constant 0 : index
    %c0_15 = arith.constant 0 : index
    %41 = vector.load %arg2[%c0_14, %c0_15] : memref<65x32xf32, #tpu.memory_space<vmem>>, vector<32x32xf32>
    %c32 = arith.constant 32 : index
    %c0_16 = arith.constant 0 : index
    %42 = vector.load %arg2[%c32, %c0_16] : memref<65x32xf32, #tpu.memory_space<vmem>>, vector<32x32xf32>
    %c64 = arith.constant 64 : index
    %c0_17 = arith.constant 0 : index
    %43 = vector.load %arg2[%c64, %c0_17] : memref<65x32xf32, #tpu.memory_space<vmem>>, vector<1x32xf32>
    %cst_18 = arith.constant dense<0.000000e+00> : vector<16x32xf32>
    %44 = tpu.matmul %40, %41, %cst_18 {dimension_numbers = #tpu.dot_dimension_numbers<[1], [0], [0], [1], [0, 0, 1, 1], [], []>} : vector<16x32xf32>, vector<32x32xf32>, vector<16x32xf32> -> vector<16x32xf32>
    %45 = vector.broadcast %43 : vector<1x32xf32> to vector<16x32xf32>
    %46 = arith.addf %44, %45 : vector<16x32xf32>
    %cst_19 = arith.constant 0.000000e+00 : f32
    %47 = vector.broadcast %cst_19 : f32 to vector<2x32xf32>
    %48 = vector.extract_strided_slice %46 {offsets = [0, 0], sizes = [2, 32], strides = [1, 1]} : vector<16x32xf32> to vector<2x32xf32>
    %cst_20 = arith.constant dense<0.000000e+00> : vector<2x32xf32>
    %49 = tpu.matmul %47, %42, %cst_20 {dimension_numbers = #tpu.dot_dimension_numbers<[1], [0], [0], [1], [0, 0, 1, 1], [], []>} : vector<2x32xf32>, vector<32x32xf32>, vector<2x32xf32> -> vector<2x32xf32>
    %50 = arith.addf %48, %49 : vector<2x32xf32>
    %51 = math.tanh %50 : vector<2x32xf32>
    %52 = vector.extract_strided_slice %46 {offsets = [2, 0], sizes = [2, 32], strides = [1, 1]} : vector<16x32xf32> to vector<2x32xf32>
    %cst_21 = arith.constant dense<0.000000e+00> : vector<2x32xf32>
    %53 = tpu.matmul %51, %42, %cst_21 {dimension_numbers = #tpu.dot_dimension_numbers<[1], [0], [0], [1], [0, 0, 1, 1], [], []>} : vector<2x32xf32>, vector<32x32xf32>, vector<2x32xf32> -> vector<2x32xf32>
    %54 = arith.addf %52, %53 : vector<2x32xf32>
    %55 = math.tanh %54 : vector<2x32xf32>
    %56 = vector.extract_strided_slice %46 {offsets = [4, 0], sizes = [2, 32], strides = [1, 1]} : vector<16x32xf32> to vector<2x32xf32>
    %cst_22 = arith.constant dense<0.000000e+00> : vector<2x32xf32>
    %57 = tpu.matmul %55, %42, %cst_22 {dimension_numbers = #tpu.dot_dimension_numbers<[1], [0], [0], [1], [0, 0, 1, 1], [], []>} : vector<2x32xf32>, vector<32x32xf32>, vector<2x32xf32> -> vector<2x32xf32>
    %58 = arith.addf %56, %57 : vector<2x32xf32>
    %59 = math.tanh %58 : vector<2x32xf32>
    %60 = vector.extract_strided_slice %46 {offsets = [6, 0], sizes = [2, 32], strides = [1, 1]} : vector<16x32xf32> to vector<2x32xf32>
    %cst_23 = arith.constant dense<0.000000e+00> : vector<2x32xf32>
    %61 = tpu.matmul %59, %42, %cst_23 {dimension_numbers = #tpu.dot_dimension_numbers<[1], [0], [0], [1], [0, 0, 1, 1], [], []>} : vector<2x32xf32>, vector<32x32xf32>, vector<2x32xf32> -> vector<2x32xf32>
    %62 = arith.addf %60, %61 : vector<2x32xf32>
    %63 = math.tanh %62 : vector<2x32xf32>
    %64 = vector.extract_strided_slice %46 {offsets = [8, 0], sizes = [2, 32], strides = [1, 1]} : vector<16x32xf32> to vector<2x32xf32>
    %cst_24 = arith.constant dense<0.000000e+00> : vector<2x32xf32>
    %65 = tpu.matmul %63, %42, %cst_24 {dimension_numbers = #tpu.dot_dimension_numbers<[1], [0], [0], [1], [0, 0, 1, 1], [], []>} : vector<2x32xf32>, vector<32x32xf32>, vector<2x32xf32> -> vector<2x32xf32>
    %66 = arith.addf %64, %65 : vector<2x32xf32>
    %67 = math.tanh %66 : vector<2x32xf32>
    %68 = vector.extract_strided_slice %46 {offsets = [10, 0], sizes = [2, 32], strides = [1, 1]} : vector<16x32xf32> to vector<2x32xf32>
    %cst_25 = arith.constant dense<0.000000e+00> : vector<2x32xf32>
    %69 = tpu.matmul %67, %42, %cst_25 {dimension_numbers = #tpu.dot_dimension_numbers<[1], [0], [0], [1], [0, 0, 1, 1], [], []>} : vector<2x32xf32>, vector<32x32xf32>, vector<2x32xf32> -> vector<2x32xf32>
    %70 = arith.addf %68, %69 : vector<2x32xf32>
    %71 = math.tanh %70 : vector<2x32xf32>
    %72 = vector.extract_strided_slice %46 {offsets = [12, 0], sizes = [2, 32], strides = [1, 1]} : vector<16x32xf32> to vector<2x32xf32>
    %cst_26 = arith.constant dense<0.000000e+00> : vector<2x32xf32>
    %73 = tpu.matmul %71, %42, %cst_26 {dimension_numbers = #tpu.dot_dimension_numbers<[1], [0], [0], [1], [0, 0, 1, 1], [], []>} : vector<2x32xf32>, vector<32x32xf32>, vector<2x32xf32> -> vector<2x32xf32>
    %74 = arith.addf %72, %73 : vector<2x32xf32>
    %75 = math.tanh %74 : vector<2x32xf32>
    %76 = vector.extract_strided_slice %46 {offsets = [14, 0], sizes = [2, 32], strides = [1, 1]} : vector<16x32xf32> to vector<2x32xf32>
    %cst_27 = arith.constant dense<0.000000e+00> : vector<2x32xf32>
    %77 = tpu.matmul %75, %42, %cst_27 {dimension_numbers = #tpu.dot_dimension_numbers<[1], [0], [0], [1], [0, 0, 1, 1], [], []>} : vector<2x32xf32>, vector<32x32xf32>, vector<2x32xf32> -> vector<2x32xf32>
    %78 = arith.addf %76, %77 : vector<2x32xf32>
    %79 = math.tanh %78 : vector<2x32xf32>
    %c0_28 = arith.constant 0 : index
    %c0_29 = arith.constant 0 : index
    %80 = vector.load %arg3[%c0_28, %c0_29] : memref<33x4xf32, #tpu.memory_space<vmem>>, vector<32x4xf32>
    %c32_30 = arith.constant 32 : index
    %c0_31 = arith.constant 0 : index
    %81 = vector.load %arg3[%c32_30, %c0_31] : memref<33x4xf32, #tpu.memory_space<vmem>>, vector<1x4xf32>
    %cst_32 = arith.constant dense<0.000000e+00> : vector<2x4xf32>
    %82 = tpu.matmul %79, %80, %cst_32 {dimension_numbers = #tpu.dot_dimension_numbers<[1], [0], [0], [1], [0, 0, 1, 1], [], []>} : vector<2x32xf32>, vector<32x4xf32>, vector<2x4xf32> -> vector<2x4xf32>
    %83 = vector.broadcast %81 : vector<1x4xf32> to vector<2x4xf32>
    %84 = arith.addf %82, %83 : vector<2x4xf32>
    %c0_33 = arith.constant 0 : index
    %c0_34 = arith.constant 0 : index
    %85 = vector.load %arg4[%c0_33, %c0_34] : memref<2x4xf32, #tpu.memory_space<vmem>>, vector<2x4xf32>
    tpu.vector_store %arg4[%c0_33, %c0_34], %84 {strides = array<i32>} : memref<2x4xf32, #tpu.memory_space<vmem>>, vector<2x4xf32>,
    return
  }
}

</mosaic_0001>

<llo_original>
// kernel: tpu_custom_call.1
$region0: #{tpu_custom_call.1}
  #allocation0 [shape = 'u32[]', space=smem, size = 0x4, offset = 0x4, fixed_abs, tag = 'smem constant byte address 0x4 - core index']
  #allocation1 [shape = 'u32[144,128]{1,0:T(1,128)}', space=vmem, size = 0x12000, scoped, tag = 'internal scratch']
  %s0 = inlined_call_operand.vmem [shape: f32[16,16], index: 0, kind: input, shape index: {}]
  %s1 = inlined_call_operand.vmem [shape: f32[49,32], index: 1, kind: input, shape index: {}]
  %s2 = inlined_call_operand.vmem [shape: f32[65,32], index: 2, kind: input, shape index: {}]
  %s3 = inlined_call_operand.vmem [shape: f32[33,4], index: 3, kind: input, shape index: {}]
  %s4 = inlined_call_operand.hbm [shape: f32[2,4], index: 4, kind: output, shape index: {}]
  %s5 = sld [smem:[#allocation0]]
  $region26: #{tpu_custom_call.1} parent=0
    _
  %s7 = ssub.s32 1, %s5
  %s8 = scalar_select 0, %s7, %s5
  $region1: #{tpu_custom_call.1} parent=0
    #allocation2 [shape = 'u8[1024]{0}', space=vmem, size = 0x400, scoped, tag = 'output window, operand 0, single buffered']
    #allocation3 [shape = 's32[1]{0}', space=sflag, size = 0x4, scoped, tag = 'scoped memory for tpu_custom_call.1']
    %9 = vsyncpa [#allocation3], 0
    // Predicated region
    $region2: #{tpu_custom_call.1} parent=1 // pred_check
      _
    $region3: #{tpu_custom_call.1} parent=1 // pred_check_branch
      %11 = sbr.rel (0) target = $region5
    $region4: #{tpu_custom_call.1} parent=1 // pred_region
      _
    $region5: #{tpu_custom_call.1} parent=1 // pred_fallthru
      _
    // Predicated region
    $region6: #{tpu_custom_call.1} parent=1 // pred_check
      _
    $region7: #{tpu_custom_call.1} parent=1 // pred_check_branch
      %13 = sbr.rel (0) target = $region9
    $region8: #{tpu_custom_call.1} parent=1 // pred_region
      _
    $region9: #{tpu_custom_call.1} parent=1 // pred_fallthru
      _
    // Predicated region
    $region10: #{tpu_custom_call.1} parent=1 // pred_check
      _
    $region11: #{tpu_custom_call.1} parent=1 // pred_check_branch
      %15 = sbr.rel (0) target = $region13
    $region12: #{tpu_custom_call.1} parent=1 // pred_region
      _
    $region13: #{tpu_custom_call.1} parent=1 // pred_fallthru
      _
    // Predicated region
    $region14: #{tpu_custom_call.1} parent=1 // pred_check
      _
    $region15: #{tpu_custom_call.1} parent=1 // pred_check_branch
      %17 = sbr.rel (0) target = $region17
    $region16: #{tpu_custom_call.1} parent=1 // pred_region
      _
    $region17: #{tpu_custom_call.1} parent=1 // pred_fallthru
      _
    %v18 = vld [vmem:[%s0] sm:$0xff]
    %v19 = vld [vmem:[%s0 + $0x8] sm:$0xff]
    %v20 = vld [vmem:[%s1] sm:$0xff]
    %v21 = vld [vmem:[%s1 + $0x8] sm:$0xff]
    %v22 = vld [vmem:[%s1 + $0x10] sm:$0xff]
    %v23 = vld [vmem:[%s1 + $0x18] sm:$0xff]
    %v24 = vld [vmem:[%s1 + $0x20] sm:$0xff]
    %v25 = vld [vmem:[%s1 + $0x28] sm:$0xff]
    %v26 = vld [vmem:[%s1 + $0x30] sm:$0x1]
    %v27 = vlaneseq
    %v28 = vshrl.u32 %v27, 7
    %v29 = vsub.s32 0, %v28
    %v30 = vrot.slane %v26, %v29
    %vm31 = vcmask 130048
    %v33 = vsel %vm31, %v18, 0
    %v36 = vsel %vm31, %v19, 0
    %38 = vmatprep.subr.mxu0 0.0
    %39 = vmatpush1.msra.mxu0 %v20
    %40 = vmatprep.subr.mxu0 0.0
    %41 = vmatpush1.msra.mxu0 %v21
    %42 = vmatprep.subr.mxu0 0.0
    %43 = vmatpush1.msra.mxu0 0.0
    %44 = vmatprep.subr.mxu0 0.0
    %45 = vmatpush1.msra.mxu0 0.0
    %46 = vmatprep.subr.mxu0 0.0
    %47 = vmatpush1.msra.mxu0 0.0
    %48 = vmatprep.subr.mxu0 0.0
    %49 = vmatpush1.msra.mxu0 0.0
    %50 = vmatprep.subr.mxu0 0.0
    %51 = vmatpush1.msra.mxu0 0.0
    %52 = vmatprep.subr.mxu0 0.0
    %53 = vmatpush1.msra.mxu0 0.0
    %54 = vmatprep.subr.mxu0 0.0
    %55 = vmatpush1.msra.mxu0 0.0
    %56 = vmatprep.subr.mxu0 0.0
    %57 = vmatpush1.msra.mxu0 0.0
    %58 = vmatprep.subr.mxu0 0.0
    %59 = vmatpush1.msra.mxu0 0.0
    %60 = vmatprep.subr.mxu0 0.0
    %61 = vmatpush1.msra.mxu0 0.0
    %62 = vmatprep.subr.mxu0 0.0
    %63 = vmatpush1.msra.mxu0 0.0
    %64 = vmatprep.subr.mxu0 0.0
    %65 = vmatpush1.msra.mxu0 0.0
    %66 = vmatprep.subr.mxu0 0.0
    %67 = vmatpush1.msra.mxu0 0.0
    %68 = vmatprep.subr.mxu0 0.0
    %69 = vmatpush1.msra.mxu0 0.0
    %70 = vmatprep.subr.mxu0 0.0
    %71 = vmatpush1.msra.mxu0 0.0
    %72 = vmatprep.subr.mxu0 0.0
    %73 = vmatpush1.msra.mxu0 0.0
    %74 = vmatprep.subr.mxu0 0.0
    %75 = vmatpush1.msra.mxu0 0.0
    %76 = vmatprep.subr.mxu0 0.0
    %77 = vmatpush1.msra.mxu0 0.0
    %78 = vmatprep.subr.mxu0 0.0
    %79 = vmatpush1.msra.mxu0 0.0
    %80 = vmatprep.subr.mxu0 0.0
    %81 = vmatpush1.msra.mxu0 0.0
    %82 = vmatprep.subr.mxu0 0.0
    %83 = vmatpush1.msra.mxu0 0.0
    %84 = vmatprep.subr.mxu0 0.0
    %85 = vmatpush1.msra.mxu0 0.0
    %86 = vmatprep.subr.mxu0 0.0
    %87 = vmatpush1.msra.mxu0 0.0
    %88 = vmatprep.subr.mxu0 0.0
    %89 = vmatpush1.msra.mxu0 0.0
    %90 = vmatprep.subr.mxu0 0.0
    %91 = vmatpush1.msra.mxu0 0.0
    %92 = vmatprep.subr.mxu0 0.0
    %93 = vmatpush1.msra.mxu0 0.0
    %94 = vmatprep.subr.mxu0 0.0
    %95 = vmatpush1.msra.mxu0 0.0
    %96 = vmatprep.subr.mxu0 0.0
    %97 = vmatpush1.msra.mxu0 0.0
    %98 = vmatprep.subr.mxu0 0.0
    %99 = vmatpush1.msra.mxu0 0.0
    %100 = vmatprep.subr.mxu0 0.0
    %101 = vmatpush1.msra.mxu0 0.0
    %102 = vmatprep.mubr.f32.mxu0 0.0
    %103 = vmatmul.mubr.f32.gmra.mrb[0].mxu0 %v33
    %v104 = vpop.f32.mrb[0].mxu0
    %v105 = vadd.f32 %v30, %v104
    %v106 = vpop.f32.mrb[0].mxu0
    %107 = vmatprep.mubr.f32.mxu0 0.0
    %108 = vmatmul.mubr.f32.gmra.mrb[0].mxu0 %v36
    %v109 = vpop.f32.mrb[0].mxu0
    %v110 = vadd.f32 %v30, %v109
    %v111 = vpop.f32.mrb[0].mxu0
    %112 = vdwg.mxu0
    %vm113 = vcmask 261120
    %v115 = vsel %vm113, 0.0, 0
    %117 = vmatprep.subr.mxu0 0.0
    %118 = vmatpush1.msra.mxu0 %v22
    %119 = vmatprep.subr.mxu0 0.0
    %120 = vmatpush1.msra.mxu0 %v23
    %121 = vmatprep.subr.mxu0 0.0
    %122 = vmatpush1.msra.mxu0 %v24
    %123 = vmatprep.subr.mxu0 0.0
    %124 = vmatpush1.msra.mxu0 %v25
    %125 = vmatprep.subr.mxu0 0.0
    %126 = vmatpush1.msra.mxu0 0.0
    %127 = vmatprep.subr.mxu0 0.0
    %128 = vmatpush1.msra.mxu0 0.0
    %129 = vmatprep.subr.mxu0 0.0
    %130 = vmatpush1.msra.mxu0 0.0
    %131 = vmatprep.subr.mxu0 0.0
    %132 = vmatpush1.msra.mxu0 0.0
    %133 = vmatprep.subr.mxu0 0.0
    %134 = vmatpush1.msra.mxu0 0.0
    %135 = vmatprep.subr.mxu0 0.0
    %136 = vmatpush1.msra.mxu0 0.0
    %137 = vmatprep.subr.mxu0 0.0
    %138 = vmatpush1.msra.mxu0 0.0
    %139 = vmatprep.subr.mxu0 0.0
    %140 = vmatpush1.msra.mxu0 0.0
    %141 = vmatprep.subr.mxu0 0.0
    %142 = vmatpush1.msra.mxu0 0.0
    %143 = vmatprep.subr.mxu0 0.0
    %144 = vmatpush1.msra.mxu0 0.0
    %145 = vmatprep.subr.mxu0 0.0
    %146 = vmatpush1.msra.mxu0 0.0
    %147 = vmatprep.subr.mxu0 0.0
    %148 = vmatpush1.msra.mxu0 0.0
    %149 = vmatprep.subr.mxu0 0.0
    %150 = vmatpush1.msra.mxu0 0.0
    %151 = vmatprep.subr.mxu0 0.0
    %152 = vmatpush1.msra.mxu0 0.0
    %153 = vmatprep.subr.mxu0 0.0
    %154 = vmatpush1.msra.mxu0 0.0
    %155 = vmatprep.subr.mxu0 0.0
    %156 = vmatpush1.msra.mxu0 0.0
    %157 = vmatprep.subr.mxu0 0.0
    %158 = vmatpush1.msra.mxu0 0.0
    %159 = vmatprep.subr.mxu0 0.0
    %160 = vmatpush1.msra.mxu0 0.0
    %161 = vmatprep.subr.mxu0 0.0
    %162 = vmatpush1.msra.mxu0 0.0
    %163 = vmatprep.subr.mxu0 0.0
    %164 = vmatpush1.msra.mxu0 0.0
    %165 = vmatprep.subr.mxu0 0.0
    %166 = vmatpush1.msra.mxu0 0.0
    %167 = vmatprep.subr.mxu0 0.0
    %168 = vmatpush1.msra.mxu0 0.0
    %169 = vmatprep.subr.mxu0 0.0
    %170 = vmatpush1.msra.mxu0 0.0
    %171 = vmatprep.subr.mxu0 0.0
    %172 = vmatpush1.msra.mxu0 0.0
    %173 = vmatprep.subr.mxu0 0.0
    %174 = vmatpush1.msra.mxu0 0.0
    %175 = vmatprep.subr.mxu0 0.0
    %176 = vmatpush1.msra.mxu0 0.0
    %177 = vmatprep.subr.mxu0 0.0
    %178 = vmatpush1.msra.mxu0 0.0
    %179 = vmatprep.subr.mxu0 0.0
    %180 = vmatpush1.msra.mxu0 0.0
    %181 = vmatprep.mubr.f32.mxu0 0.0
    %182 = vmatmul.mubr.f32.gmra.mrb[0].mxu0 %v115
    %v183 = vpop.f32.mrb[0].mxu0
    %v184 = vadd.f32 0.0, %v183
    %v185 = vpop.f32.mrb[0].mxu0
    %186 = vdwg.mxu0
    %v187 = vadd.f32 %v105, %v184
    %v188 = vtanh.pop %v187
    %v190 = vsel %vm113, %v188, 0
    %192 = vmatprep.subr.mxu0 0.0
    %193 = vmatpush1.msra.mxu0 %v22
    %194 = vmatprep.subr.mxu0 0.0
    %195 = vmatpush1.msra.mxu0 %v23
    %196 = vmatprep.subr.mxu0 0.0
    %197 = vmatpush1.msra.mxu0 %v24
    %198 = vmatprep.subr.mxu0 0.0
    %199 = vmatpush1.msra.mxu0 %v25
    %200 = vmatprep.subr.mxu0 0.0
    %201 = vmatpush1.msra.mxu0 0.0
    %202 = vmatprep.subr.mxu0 0.0
    %203 = vmatpush1.msra.mxu0 0.0
    %204 = vmatprep.subr.mxu0 0.0
    %205 = vmatpush1.msra.mxu0 0.0
    %206 = vmatprep.subr.mxu0 0.0
    %207 = vmatpush1.msra.mxu0 0.0
    %208 = vmatprep.subr.mxu0 0.0
    %209 = vmatpush1.msra.mxu0 0.0
    %210 = vmatprep.subr.mxu0 0.0
    %211 = vmatpush1.msra.mxu0 0.0
    %212 = vmatprep.subr.mxu0 0.0
    %213 = vmatpush1.msra.mxu0 0.0
    %214 = vmatprep.subr.mxu0 0.0
    %215 = vmatpush1.msra.mxu0 0.0
    %216 = vmatprep.subr.mxu0 0.0
    %217 = vmatpush1.msra.mxu0 0.0
    %218 = vmatprep.subr.mxu0 0.0
    %219 = vmatpush1.msra.mxu0 0.0
    %220 = vmatprep.subr.mxu0 0.0
    %221 = vmatpush1.msra.mxu0 0.0
    %222 = vmatprep.subr.mxu0 0.0
    %223 = vmatpush1.msra.mxu0 0.0
    %224 = vmatprep.subr.mxu0 0.0
    %225 = vmatpush1.msra.mxu0 0.0
    %226 = vmatprep.subr.mxu0 0.0
    %227 = vmatpush1.msra.mxu0 0.0
    %228 = vmatprep.subr.mxu0 0.0
    %229 = vmatpush1.msra.mxu0 0.0
    %230 = vmatprep.subr.mxu0 0.0
    %231 = vmatpush1.msra.mxu0 0.0
    %232 = vmatprep.subr.mxu0 0.0
    %233 = vmatpush1.msra.mxu0 0.0
    %234 = vmatprep.subr.mxu0 0.0
    %235 = vmatpush1.msra.mxu0 0.0
    %236 = vmatprep.subr.mxu0 0.0
    %237 = vmatpush1.msra.mxu0 0.0
    %238 = vmatprep.subr.mxu0 0.0
    %239 = vmatpush1.msra.mxu0 0.0
    %240 = vmatprep.subr.mxu0 0.0
    %241 = vmatpush1.msra.mxu0 0.0
    %242 = vmatprep.subr.mxu0 0.0
    %243 = vmatpush1.msra.mxu0 0.0
    %244 = vmatprep.subr.mxu0 0.0
    %245 = vmatpush1.msra.mxu0 0.0
    %246 = vmatprep.subr.mxu0 0.0
    %247 = vmatpush1.msra.mxu0 0.0
    %248 = vmatprep.subr.mxu0 0.0
    %249 = vmatpush1.msra.mxu0 0.0
    %250 = vmatprep.subr.mxu0 0.0
    %251 = vmatpush1.msra.mxu0 0.0
    %252 = vmatprep.subr.mxu0 0.0
    %253 = vmatpush1.msra.mxu0 0.0
    %254 = vmatprep.subr.mxu0 0.0
    %255 = vmatpush1.msra.mxu0 0.0
    %256 = vmatprep.mubr.f32.mxu0 0.0
    %257 = vmatmul.mubr.f32.gmra.mrb[0].mxu0 %v190
    %v258 = vpop.f32.mrb[0].mxu0
    %v259 = vadd.f32 0.0, %v258
    %v260 = vpop.f32.mrb[0].mxu0
    %261 = vdwg.mxu0
    %v263 = vrot.slane %v259, 6
    %v265 = vadd.f32 %v105, %v263
    %v266 = vtanh.pop %v265
    %v268 = vrot.slane %v266, 2
    %v269 = vsel %vm113, %v268, 0
    %271 = vmatprep.subr.mxu0 0.0
    %272 = vmatpush1.msra.mxu0 %v22
    %273 = vmatprep.subr.mxu0 0.0
    %274 = vmatpush1.msra.mxu0 %v23
    %275 = vmatprep.subr.mxu0 0.0
    %276 = vmatpush1.msra.mxu0 %v24
    %277 = vmatprep.subr.mxu0 0.0
    %278 = vmatpush1.msra.mxu0 %v25
    %279 = vmatprep.subr.mxu0 0.0
    %280 = vmatpush1.msra.mxu0 0.0
    %281 = vmatprep.subr.mxu0 0.0
    %282 = vmatpush1.msra.mxu0 0.0
    %283 = vmatprep.subr.mxu0 0.0
    %284 = vmatpush1.msra.mxu0 0.0
    %285 = vmatprep.subr.mxu0 0.0
    %286 = vmatpush1.msra.mxu0 0.0
    %287 = vmatprep.subr.mxu0 0.0
    %288 = vmatpush1.msra.mxu0 0.0
    %289 = vmatprep.subr.mxu0 0.0
    %290 = vmatpush1.msra.mxu0 0.0
    %291 = vmatprep.subr.mxu0 0.0
    %292 = vmatpush1.msra.mxu0 0.0
    %293 = vmatprep.subr.mxu0 0.0
    %294 = vmatpush1.msra.mxu0 0.0
    %295 = vmatprep.subr.mxu0 0.0
    %296 = vmatpush1.msra.mxu0 0.0
    %297 = vmatprep.subr.mxu0 0.0
    %298 = vmatpush1.msra.mxu0 0.0
    %299 = vmatprep.subr.mxu0 0.0
    %300 = vmatpush1.msra.mxu0 0.0
    %301 = vmatprep.subr.mxu0 0.0
    %302 = vmatpush1.msra.mxu0 0.0
    %303 = vmatprep.subr.mxu0 0.0
    %304 = vmatpush1.msra.mxu0 0.0
    %305 = vmatprep.subr.mxu0 0.0
    %306 = vmatpush1.msra.mxu0 0.0
    %307 = vmatprep.subr.mxu0 0.0
    %308 = vmatpush1.msra.mxu0 0.0
    %309 = vmatprep.subr.mxu0 0.0
    %310 = vmatpush1.msra.mxu0 0.0
    %311 = vmatprep.subr.mxu0 0.0
    %312 = vmatpush1.msra.mxu0 0.0
    %313 = vmatprep.subr.mxu0 0.0
    %314 = vmatpush1.msra.mxu0 0.0
    %315 = vmatprep.subr.mxu0 0.0
    %316 = vmatpush1.msra.mxu0 0.0
    %317 = vmatprep.subr.mxu0 0.0
    %318 = vmatpush1.msra.mxu0 0.0
    %319 = vmatprep.subr.mxu0 0.0
    %320 = vmatpush1.msra.mxu0 0.0
    %321 = vmatprep.subr.mxu0 0.0
    %322 = vmatpush1.msra.mxu0 0.0
    %323 = vmatprep.subr.mxu0 0.0
    %324 = vmatpush1.msra.mxu0 0.0
    %325 = vmatprep.subr.mxu0 0.0
    %326 = vmatpush1.msra.mxu0 0.0
    %327 = vmatprep.subr.mxu0 0.0
    %328 = vmatpush1.msra.mxu0 0.0
    %329 = vmatprep.subr.mxu0 0.0
    %330 = vmatpush1.msra.mxu0 0.0
    %331 = vmatprep.subr.mxu0 0.0
    %332 = vmatpush1.msra.mxu0 0.0
    %333 = vmatprep.subr.mxu0 0.0
    %334 = vmatpush1.msra.mxu0 0.0
    %335 = vmatprep.mubr.f32.mxu0 0.0
    %336 = vmatmul.mubr.f32.gmra.mrb[0].mxu0 %v269
    %v337 = vpop.f32.mrb[0].mxu0
    %v338 = vadd.f32 0.0, %v337
    %v339 = vpop.f32.mrb[0].mxu0
    %340 = vdwg.mxu0
    %v342 = vrot.slane %v338, 4
    %v344 = vadd.f32 %v105, %v342
    %v345 = vtanh.pop %v344
    %v347 = vrot.slane %v345, 4
    %v348 = vsel %vm113, %v347, 0
    %350 = vmatprep.subr.mxu0 0.0
    %351 = vmatpush1.msra.mxu0 %v22
    %352 = vmatprep.subr.mxu0 0.0
    %353 = vmatpush1.msra.mxu0 %v23
    %354 = vmatprep.subr.mxu0 0.0
    %355 = vmatpush1.msra.mxu0 %v24
    %356 = vmatprep.subr.mxu0 0.0
    %357 = vmatpush1.msra.mxu0 %v25
    %358 = vmatprep.subr.mxu0 0.0
    %359 = vmatpush1.msra.mxu0 0.0
    %360 = vmatprep.subr.mxu0 0.0
    %361 = vmatpush1.msra.mxu0 0.0
    %362 = vmatprep.subr.mxu0 0.0
    %363 = vmatpush1.msra.mxu0 0.0
    %364 = vmatprep.subr.mxu0 0.0
    %365 = vmatpush1.msra.mxu0 0.0
    %366 = vmatprep.subr.mxu0 0.0
    %367 = vmatpush1.msra.mxu0 0.0
    %368 = vmatprep.subr.mxu0 0.0
    %369 = vmatpush1.msra.mxu0 0.0
    %370 = vmatprep.subr.mxu0 0.0
    %371 = vmatpush1.msra.mxu0 0.0
    %372 = vmatprep.subr.mxu0 0.0
    %373 = vmatpush1.msra.mxu0 0.0
    %374 = vmatprep.subr.mxu0 0.0
    %375 = vmatpush1.msra.mxu0 0.0
    %376 = vmatprep.subr.mxu0 0.0
    %377 = vmatpush1.msra.mxu0 0.0
    %378 = vmatprep.subr.mxu0 0.0
    %379 = vmatpush1.msra.mxu0 0.0
    %380 = vmatprep.subr.mxu0 0.0
    %381 = vmatpush1.msra.mxu0 0.0
    %382 = vmatprep.subr.mxu0 0.0
    %383 = vmatpush1.msra.mxu0 0.0
    %384 = vmatprep.subr.mxu0 0.0
    %385 = vmatpush1.msra.mxu0 0.0
    %386 = vmatprep.subr.mxu0 0.0
    %387 = vmatpush1.msra.mxu0 0.0
    %388 = vmatprep.subr.mxu0 0.0
    %389 = vmatpush1.msra.mxu0 0.0
    %390 = vmatprep.subr.mxu0 0.0
    %391 = vmatpush1.msra.mxu0 0.0
    %392 = vmatprep.subr.mxu0 0.0
    %393 = vmatpush1.msra.mxu0 0.0
    %394 = vmatprep.subr.mxu0 0.0
    %395 = vmatpush1.msra.mxu0 0.0
    %396 = vmatprep.subr.mxu0 0.0
    %397 = vmatpush1.msra.mxu0 0.0
    %398 = vmatprep.subr.mxu0 0.0
    %399 = vmatpush1.msra.mxu0 0.0
    %400 = vmatprep.subr.mxu0 0.0
    %401 = vmatpush1.msra.mxu0 0.0
    %402 = vmatprep.subr.mxu0 0.0
    %403 = vmatpush1.msra.mxu0 0.0
    %404 = vmatprep.subr.mxu0 0.0
    %405 = vmatpush1.msra.mxu0 0.0
    %406 = vmatprep.subr.mxu0 0.0
    %407 = vmatpush1.msra.mxu0 0.0
    %408 = vmatprep.subr.mxu0 0.0
    %409 = vmatpush1.msra.mxu0 0.0
    %410 = vmatprep.subr.mxu0 0.0
    %411 = vmatpush1.msra.mxu0 0.0
    %412 = vmatprep.subr.mxu0 0.0
    %413 = vmatpush1.msra.mxu0 0.0
    %414 = vmatprep.mubr.f32.mxu0 0.0
    %415 = vmatmul.mubr.f32.gmra.mrb[0].mxu0 %v348
    %v416 = vpop.f32.mrb[0].mxu0
    %v417 = vadd.f32 0.0, %v416
    %v418 = vpop.f32.mrb[0].mxu0
    %419 = vdwg.mxu0
    %v421 = vrot.slane %v417, 2
    %v423 = vadd.f32 %v105, %v421
    %v424 = vtanh.pop %v423
    %v426 = vrot.slane %v424, 6
    %v427 = vsel %vm113, %v426, 0
    %429 = vmatprep.subr.mxu0 0.0
    %430 = vmatpush1.msra.mxu0 %v22
    %431 = vmatprep.subr.mxu0 0.0
    %432 = vmatpush1.msra.mxu0 %v23
    %433 = vmatprep.subr.mxu0 0.0
    %434 = vmatpush1.msra.mxu0 %v24
    %435 = vmatprep.subr.mxu0 0.0
    %436 = vmatpush1.msra.mxu0 %v25
    %437 = vmatprep.subr.mxu0 0.0
    %438 = vmatpush1.msra.mxu0 0.0
    %439 = vmatprep.subr.mxu0 0.0
    %440 = vmatpush1.msra.mxu0 0.0
    %441 = vmatprep.subr.mxu0 0.0
    %442 = vmatpush1.msra.mxu0 0.0
    %443 = vmatprep.subr.mxu0 0.0
    %444 = vmatpush1.msra.mxu0 0.0
    %445 = vmatprep.subr.mxu0 0.0
    %446 = vmatpush1.msra.mxu0 0.0
    %447 = vmatprep.subr.mxu0 0.0
    %448 = vmatpush1.msra.mxu0 0.0
    %449 = vmatprep.subr.mxu0 0.0
    %450 = vmatpush1.msra.mxu0 0.0
    %451 = vmatprep.subr.mxu0 0.0
    %452 = vmatpush1.msra.mxu0 0.0
    %453 = vmatprep.subr.mxu0 0.0
    %454 = vmatpush1.msra.mxu0 0.0
    %455 = vmatprep.subr.mxu0 0.0
    %456 = vmatpush1.msra.mxu0 0.0
    %457 = vmatprep.subr.mxu0 0.0
    %458 = vmatpush1.msra.mxu0 0.0
    %459 = vmatprep.subr.mxu0 0.0
    %460 = vmatpush1.msra.mxu0 0.0
    %461 = vmatprep.subr.mxu0 0.0
    %462 = vmatpush1.msra.mxu0 0.0
    %463 = vmatprep.subr.mxu0 0.0
    %464 = vmatpush1.msra.mxu0 0.0
    %465 = vmatprep.subr.mxu0 0.0
    %466 = vmatpush1.msra.mxu0 0.0
    %467 = vmatprep.subr.mxu0 0.0
    %468 = vmatpush1.msra.mxu0 0.0
    %469 = vmatprep.subr.mxu0 0.0
    %470 = vmatpush1.msra.mxu0 0.0
    %471 = vmatprep.subr.mxu0 0.0
    %472 = vmatpush1.msra.mxu0 0.0
    %473 = vmatprep.subr.mxu0 0.0
    %474 = vmatpush1.msra.mxu0 0.0
    %475 = vmatprep.subr.mxu0 0.0
    %476 = vmatpush1.msra.mxu0 0.0
    %477 = vmatprep.subr.mxu0 0.0
    %478 = vmatpush1.msra.mxu0 0.0
    %479 = vmatprep.subr.mxu0 0.0
    %480 = vmatpush1.msra.mxu0 0.0
    %481 = vmatprep.subr.mxu0 0.0
    %482 = vmatpush1.msra.mxu0 0.0
    %483 = vmatprep.subr.mxu0 0.0
    %484 = vmatpush1.msra.mxu0 0.0
    %485 = vmatprep.subr.mxu0 0.0
    %486 = vmatpush1.msra.mxu0 0.0
    %487 = vmatprep.subr.mxu0 0.0
    %488 = vmatpush1.msra.mxu0 0.0
    %489 = vmatprep.subr.mxu0 0.0
    %490 = vmatpush1.msra.mxu0 0.0
    %491 = vmatprep.subr.mxu0 0.0
    %492 = vmatpush1.msra.mxu0 0.0
    %493 = vmatprep.mubr.f32.mxu0 0.0
    %494 = vmatmul.mubr.f32.gmra.mrb[0].mxu0 %v427
    %v495 = vpop.f32.mrb[0].mxu0
    %v496 = vadd.f32 0.0, %v495
    %v497 = vpop.f32.mrb[0].mxu0
    %498 = vdwg.mxu0
    %v499 = vadd.f32 %v110, %v496
    %v500 = vtanh.pop %v499
    %v502 = vsel %vm113, %v500, 0
    %504 = vmatprep.subr.mxu0 0.0
    %505 = vmatpush1.msra.mxu0 %v22
    %506 = vmatprep.subr.mxu0 0.0
    %507 = vmatpush1.msra.mxu0 %v23
    %508 = vmatprep.subr.mxu0 0.0
    %509 = vmatpush1.msra.mxu0 %v24
    %510 = vmatprep.subr.mxu0 0.0
    %511 = vmatpush1.msra.mxu0 %v25
    %512 = vmatprep.subr.mxu0 0.0
    %513 = vmatpush1.msra.mxu0 0.0
    %514 = vmatprep.subr.mxu0 0.0
    %515 = vmatpush1.msra.mxu0 0.0
    %516 = vmatprep.subr.mxu0 0.0
    %517 = vmatpush1.msra.mxu0 0.0
    %518 = vmatprep.subr.mxu0 0.0
    %519 = vmatpush1.msra.mxu0 0.0
    %520 = vmatprep.subr.mxu0 0.0
    %521 = vmatpush1.msra.mxu0 0.0
    %522 = vmatprep.subr.mxu0 0.0
    %523 = vmatpush1.msra.mxu0 0.0
    %524 = vmatprep.subr.mxu0 0.0
    %525 = vmatpush1.msra.mxu0 0.0
    %526 = vmatprep.subr.mxu0 0.0
    %527 = vmatpush1.msra.mxu0 0.0
    %528 = vmatprep.subr.mxu0 0.0
    %529 = vmatpush1.msra.mxu0 0.0
    %530 = vmatprep.subr.mxu0 0.0
    %531 = vmatpush1.msra.mxu0 0.0
    %532 = vmatprep.subr.mxu0 0.0
    %533 = vmatpush1.msra.mxu0 0.0
    %534 = vmatprep.subr.mxu0 0.0
    %535 = vmatpush1.msra.mxu0 0.0
    %536 = vmatprep.subr.mxu0 0.0
    %537 = vmatpush1.msra.mxu0 0.0
    %538 = vmatprep.subr.mxu0 0.0
    %539 = vmatpush1.msra.mxu0 0.0
    %540 = vmatprep.subr.mxu0 0.0
    %541 = vmatpush1.msra.mxu0 0.0
    %542 = vmatprep.subr.mxu0 0.0
    %543 = vmatpush1.msra.mxu0 0.0
    %544 = vmatprep.subr.mxu0 0.0
    %545 = vmatpush1.msra.mxu0 0.0
    %546 = vmatprep.subr.mxu0 0.0
    %547 = vmatpush1.msra.mxu0 0.0
    %548 = vmatprep.subr.mxu0 0.0
    %549 = vmatpush1.msra.mxu0 0.0
    %550 = vmatprep.subr.mxu0 0.0
    %551 = vmatpush1.msra.mxu0 0.0
    %552 = vmatprep.subr.mxu0 0.0
    %553 = vmatpush1.msra.mxu0 0.0
    %554 = vmatprep.subr.mxu0 0.0
    %555 = vmatpush1.msra.mxu0 0.0
    %556 = vmatprep.subr.mxu0 0.0
    %557 = vmatpush1.msra.mxu0 0.0
    %558 = vmatprep.subr.mxu0 0.0
    %559 = vmatpush1.msra.mxu0 0.0
    %560 = vmatprep.subr.mxu0 0.0
    %561 = vmatpush1.msra.mxu0 0.0
    %562 = vmatprep.subr.mxu0 0.0
    %563 = vmatpush1.msra.mxu0 0.0
    %564 = vmatprep.subr.mxu0 0.0
    %565 = vmatpush1.msra.mxu0 0.0
    %566 = vmatprep.subr.mxu0 0.0
    %567 = vmatpush1.msra.mxu0 0.0
    %568 = vmatprep.mubr.f32.mxu0 0.0
    %569 = vmatmul.mubr.f32.gmra.mrb[0].mxu0 %v502
    %v570 = vpop.f32.mrb[0].mxu0
    %v571 = vadd.f32 0.0, %v570
    %v572 = vpop.f32.mrb[0].mxu0
    %573 = vdwg.mxu0
    %v575 = vrot.slane %v571, 6
    %v577 = vadd.f32 %v110, %v575
    %v578 = vtanh.pop %v577
    %v580 = vrot.slane %v578, 2
    %v581 = vsel %vm113, %v580, 0
    %583 = vmatprep.subr.mxu0 0.0
    %584 = vmatpush1.msra.mxu0 %v22
    %585 = vmatprep.subr.mxu0 0.0
    %586 = vmatpush1.msra.mxu0 %v23
    %587 = vmatprep.subr.mxu0 0.0
    %588 = vmatpush1.msra.mxu0 %v24
    %589 = vmatprep.subr.mxu0 0.0
    %590 = vmatpush1.msra.mxu0 %v25
    %591 = vmatprep.subr.mxu0 0.0
    %592 = vmatpush1.msra.mxu0 0.0
    %593 = vmatprep.subr.mxu0 0.0
    %594 = vmatpush1.msra.mxu0 0.0
    %595 = vmatprep.subr.mxu0 0.0
    %596 = vmatpush1.msra.mxu0 0.0
    %597 = vmatprep.subr.mxu0 0.0
    %598 = vmatpush1.msra.mxu0 0.0
    %599 = vmatprep.subr.mxu0 0.0
    %600 = vmatpush1.msra.mxu0 0.0
    %601 = vmatprep.subr.mxu0 0.0
    %602 = vmatpush1.msra.mxu0 0.0
    %603 = vmatprep.subr.mxu0 0.0
    %604 = vmatpush1.msra.mxu0 0.0
    %605 = vmatprep.subr.mxu0 0.0
    %606 = vmatpush1.msra.mxu0 0.0
    %607 = vmatprep.subr.mxu0 0.0
    %608 = vmatpush1.msra.mxu0 0.0
    %609 = vmatprep.subr.mxu0 0.0
    %610 = vmatpush1.msra.mxu0 0.0
    %611 = vmatprep.subr.mxu0 0.0
    %612 = vmatpush1.msra.mxu0 0.0
    %613 = vmatprep.subr.mxu0 0.0
    %614 = vmatpush1.msra.mxu0 0.0
    %615 = vmatprep.subr.mxu0 0.0
    %616 = vmatpush1.msra.mxu0 0.0
    %617 = vmatprep.subr.mxu0 0.0
    %618 = vmatpush1.msra.mxu0 0.0
    %619 = vmatprep.subr.mxu0 0.0
    %620 = vmatpush1.msra.mxu0 0.0
    %621 = vmatprep.subr.mxu0 0.0
    %622 = vmatpush1.msra.mxu0 0.0
    %623 = vmatprep.subr.mxu0 0.0
    %624 = vmatpush1.msra.mxu0 0.0
    %625 = vmatprep.subr.mxu0 0.0
    %626 = vmatpush1.msra.mxu0 0.0
    %627 = vmatprep.subr.mxu0 0.0
    %628 = vmatpush1.msra.mxu0 0.0
    %629 = vmatprep.subr.mxu0 0.0
    %630 = vmatpush1.msra.mxu0 0.0
    %631 = vmatprep.subr.mxu0 0.0
    %632 = vmatpush1.msra.mxu0 0.0
    %633 = vmatprep.subr.mxu0 0.0
    %634 = vmatpush1.msra.mxu0 0.0
    %635 = vmatprep.subr.mxu0 0.0
    %636 = vmatpush1.msra.mxu0 0.0
    %637 = vmatprep.subr.mxu0 0.0
    %638 = vmatpush1.msra.mxu0 0.0
    %639 = vmatprep.subr.mxu0 0.0
    %640 = vmatpush1.msra.mxu0 0.0
    %641 = vmatprep.subr.mxu0 0.0
    %642 = vmatpush1.msra.mxu0 0.0
    %643 = vmatprep.subr.mxu0 0.0
    %644 = vmatpush1.msra.mxu0 0.0
    %645 = vmatprep.subr.mxu0 0.0
    %646 = vmatpush1.msra.mxu0 0.0
    %647 = vmatprep.mubr.f32.mxu0 0.0
    %648 = vmatmul.mubr.f32.gmra.mrb[0].mxu0 %v581
    %v649 = vpop.f32.mrb[0].mxu0
    %v650 = vadd.f32 0.0, %v649
    %v651 = vpop.f32.mrb[0].mxu0
    %652 = vdwg.mxu0
    %v654 = vrot.slane %v650, 4
    %v656 = vadd.f32 %v110, %v654
    %v657 = vtanh.pop %v656
    %v659 = vrot.slane %v657, 4
    %v660 = vsel %vm113, %v659, 0
    %662 = vmatprep.subr.mxu0 0.0
    %663 = vmatpush1.msra.mxu0 %v22
    %664 = vmatprep.subr.mxu0 0.0
    %665 = vmatpush1.msra.mxu0 %v23
    %666 = vmatprep.subr.mxu0 0.0
    %667 = vmatpush1.msra.mxu0 %v24
    %668 = vmatprep.subr.mxu0 0.0
    %669 = vmatpush1.msra.mxu0 %v25
    %670 = vmatprep.subr.mxu0 0.0
    %671 = vmatpush1.msra.mxu0 0.0
    %672 = vmatprep.subr.mxu0 0.0
    %673 = vmatpush1.msra.mxu0 0.0
    %674 = vmatprep.subr.mxu0 0.0
    %675 = vmatpush1.msra.mxu0 0.0
    %676 = vmatprep.subr.mxu0 0.0
    %677 = vmatpush1.msra.mxu0 0.0
    %678 = vmatprep.subr.mxu0 0.0
    %679 = vmatpush1.msra.mxu0 0.0
    %680 = vmatprep.subr.mxu0 0.0
    %681 = vmatpush1.msra.mxu0 0.0
    %682 = vmatprep.subr.mxu0 0.0
    %683 = vmatpush1.msra.mxu0 0.0
    %684 = vmatprep.subr.mxu0 0.0
    %685 = vmatpush1.msra.mxu0 0.0
    %686 = vmatprep.subr.mxu0 0.0
    %687 = vmatpush1.msra.mxu0 0.0
    %688 = vmatprep.subr.mxu0 0.0
    %689 = vmatpush1.msra.mxu0 0.0
    %690 = vmatprep.subr.mxu0 0.0
    %691 = vmatpush1.msra.mxu0 0.0
    %692 = vmatprep.subr.mxu0 0.0
    %693 = vmatpush1.msra.mxu0 0.0
    %694 = vmatprep.subr.mxu0 0.0
    %695 = vmatpush1.msra.mxu0 0.0
    %696 = vmatprep.subr.mxu0 0.0
    %697 = vmatpush1.msra.mxu0 0.0
    %698 = vmatprep.subr.mxu0 0.0
    %699 = vmatpush1.msra.mxu0 0.0
    %700 = vmatprep.subr.mxu0 0.0
    %701 = vmatpush1.msra.mxu0 0.0
    %702 = vmatprep.subr.mxu0 0.0
    %703 = vmatpush1.msra.mxu0 0.0
    %704 = vmatprep.subr.mxu0 0.0
    %705 = vmatpush1.msra.mxu0 0.0
    %706 = vmatprep.subr.mxu0 0.0
    %707 = vmatpush1.msra.mxu0 0.0
    %708 = vmatprep.subr.mxu0 0.0
    %709 = vmatpush1.msra.mxu0 0.0
    %710 = vmatprep.subr.mxu0 0.0
    %711 = vmatpush1.msra.mxu0 0.0
    %712 = vmatprep.subr.mxu0 0.0
    %713 = vmatpush1.msra.mxu0 0.0
    %714 = vmatprep.subr.mxu0 0.0
    %715 = vmatpush1.msra.mxu0 0.0
    %716 = vmatprep.subr.mxu0 0.0
    %717 = vmatpush1.msra.mxu0 0.0
    %718 = vmatprep.subr.mxu0 0.0
    %719 = vmatpush1.msra.mxu0 0.0
    %720 = vmatprep.subr.mxu0 0.0
    %721 = vmatpush1.msra.mxu0 0.0
    %722 = vmatprep.subr.mxu0 0.0
    %723 = vmatpush1.msra.mxu0 0.0
    %724 = vmatprep.subr.mxu0 0.0
    %725 = vmatpush1.msra.mxu0 0.0
    %726 = vmatprep.mubr.f32.mxu0 0.0
    %727 = vmatmul.mubr.f32.gmra.mrb[0].mxu0 %v660
    %v728 = vpop.f32.mrb[0].mxu0
    %v729 = vadd.f32 0.0, %v728
    %v730 = vpop.f32.mrb[0].mxu0
    %731 = vdwg.mxu0
    %v733 = vrot.slane %v729, 2
    %v735 = vadd.f32 %v110, %v733
    %v736 = vtanh.pop %v735
    %vm737 = vcmask 1041408
    %v738 = vsel %vm737, %v188, %v266
    %vm739 = vcmask 1043456
    %v740 = vsel %vm739, %v738, %v345
    %vm741 = vcmask 1045504
    %v742 = vsel %vm741, %v740, %v424
    %v743 = vsel %vm737, %v500, %v578
    %v744 = vsel %vm739, %v743, %v657
    %v745 = vsel %vm741, %v744, %v736
    %v746 = vld [vmem:[%s2] sm:$0xff]
    %v747 = vld [vmem:[%s2 + $0x8] sm:$0xff]
    %v748 = vld [vmem:[%s2 + $0x10] sm:$0xff]
    %v749 = vld [vmem:[%s2 + $0x18] sm:$0xff]
    %v750 = vld [vmem:[%s2 + $0x20] sm:$0xff]
    %v751 = vld [vmem:[%s2 + $0x28] sm:$0xff]
    %v752 = vld [vmem:[%s2 + $0x30] sm:$0xff]
    %v753 = vld [vmem:[%s2 + $0x38] sm:$0xff]
    %v754 = vld [vmem:[%s2 + $0x40] sm:$0x1]
    %v755 = vlaneseq
    %v756 = vshrl.u32 %v755, 7
    %v757 = vsub.s32 0, %v756
    %v758 = vrot.slane %v754, %v757
    %v760 = vsel %vm113, %v742, 0
    %v763 = vsel %vm113, %v745, 0
    %765 = vmatprep.subr.mxu0 0.0
    %766 = vmatpush1.msra.mxu0 %v746
    %767 = vmatprep.subr.mxu0 0.0
    %768 = vmatpush1.msra.mxu0 %v747
    %769 = vmatprep.subr.mxu0 0.0
    %770 = vmatpush1.msra.mxu0 %v748
    %771 = vmatprep.subr.mxu0 0.0
    %772 = vmatpush1.msra.mxu0 %v749
    %773 = vmatprep.subr.mxu0 0.0
    %774 = vmatpush1.msra.mxu0 0.0
    %775 = vmatprep.subr.mxu0 0.0
    %776 = vmatpush1.msra.mxu0 0.0
    %777 = vmatprep.subr.mxu0 0.0
    %778 = vmatpush1.msra.mxu0 0.0
    %779 = vmatprep.subr.mxu0 0.0
    %780 = vmatpush1.msra.mxu0 0.0
    %781 = vmatprep.subr.mxu0 0.0
    %782 = vmatpush1.msra.mxu0 0.0
    %783 = vmatprep.subr.mxu0 0.0
    %784 = vmatpush1.msra.mxu0 0.0
    %785 = vmatprep.subr.mxu0 0.0
    %786 = vmatpush1.msra.mxu0 0.0
    %787 = vmatprep.subr.mxu0 0.0
    %788 = vmatpush1.msra.mxu0 0.0
    %789 = vmatprep.subr.mxu0 0.0
    %790 = vmatpush1.msra.mxu0 0.0
    %791 = vmatprep.subr.mxu0 0.0
    %792 = vmatpush1.msra.mxu0 0.0
    %793 = vmatprep.subr.mxu0 0.0
    %794 = vmatpush1.msra.mxu0 0.0
    %795 = vmatprep.subr.mxu0 0.0
    %796 = vmatpush1.msra.mxu0 0.0
    %797 = vmatprep.subr.mxu0 0.0
    %798 = vmatpush1.msra.mxu0 0.0
    %799 = vmatprep.subr.mxu0 0.0
    %800 = vmatpush1.msra.mxu0 0.0
    %801 = vmatprep.subr.mxu0 0.0
    %802 = vmatpush1.msra.mxu0 0.0
    %803 = vmatprep.subr.mxu0 0.0
    %804 = vmatpush1.msra.mxu0 0.0
    %805 = vmatprep.subr.mxu0 0.0
    %806 = vmatpush1.msra.mxu0 0.0
    %807 = vmatprep.subr.mxu0 0.0
    %808 = vmatpush1.msra.mxu0 0.0
    %809 = vmatprep.subr.mxu0 0.0
    %810 = vmatpush1.msra.mxu0 0.0
    %811 = vmatprep.subr.mxu0 0.0
    %812 = vmatpush1.msra.mxu0 0.0
    %813 = vmatprep.subr.mxu0 0.0
    %814 = vmatpush1.msra.mxu0 0.0
    %815 = vmatprep.subr.mxu0 0.0
    %816 = vmatpush1.msra.mxu0 0.0
    %817 = vmatprep.subr.mxu0 0.0
    %818 = vmatpush1.msra.mxu0 0.0
    %819 = vmatprep.subr.mxu0 0.0
    %820 = vmatpush1.msra.mxu0 0.0
    %821 = vmatprep.subr.mxu0 0.0
    %822 = vmatpush1.msra.mxu0 0.0
    %823 = vmatprep.subr.mxu0 0.0
    %824 = vmatpush1.msra.mxu0 0.0
    %825 = vmatprep.subr.mxu0 0.0
    %826 = vmatpush1.msra.mxu0 0.0
    %827 = vmatprep.subr.mxu0 0.0
    %828 = vmatpush1.msra.mxu0 0.0
    %829 = vmatprep.mubr.f32.mxu0 0.0
    %830 = vmatmul.mubr.f32.gmra.mrb[0].mxu0 %v760
    %v831 = vpop.f32.mrb[0].mxu0
    %v832 = vadd.f32 %v758, %v831
    %v833 = vpop.f32.mrb[0].mxu0
    %834 = vmatprep.mubr.f32.mxu0 0.0
    %835 = vmatmul.mubr.f32.gmra.mrb[0].mxu0 %v763
    %v836 = vpop.f32.mrb[0].mxu0
    %v837 = vadd.f32 %v758, %v836
    %v838 = vpop.f32.mrb[0].mxu0
    %839 = vdwg.mxu0
    %840 = vmatprep.subr.mxu0 0.0
    %841 = vmatpush1.msra.mxu0 %v750
    %842 = vmatprep.subr.mxu0 0.0
    %843 = vmatpush1.msra.mxu0 %v751
    %844 = vmatprep.subr.mxu0 0.0
    %845 = vmatpush1.msra.mxu0 %v752
    %846 = vmatprep.subr.mxu0 0.0
    %847 = vmatpush1.msra.mxu0 %v753
    %848 = vmatprep.subr.mxu0 0.0
    %849 = vmatpush1.msra.mxu0 0.0
    %850 = vmatprep.subr.mxu0 0.0
    %851 = vmatpush1.msra.mxu0 0.0
    %852 = vmatprep.subr.mxu0 0.0
    %853 = vmatpush1.msra.mxu0 0.0
    %854 = vmatprep.subr.mxu0 0.0
    %855 = vmatpush1.msra.mxu0 0.0
    %856 = vmatprep.subr.mxu0 0.0
    %857 = vmatpush1.msra.mxu0 0.0
    %858 = vmatprep.subr.mxu0 0.0
    %859 = vmatpush1.msra.mxu0 0.0
    %860 = vmatprep.subr.mxu0 0.0
    %861 = vmatpush1.msra.mxu0 0.0
    %862 = vmatprep.subr.mxu0 0.0
    %863 = vmatpush1.msra.mxu0 0.0
    %864 = vmatprep.subr.mxu0 0.0
    %865 = vmatpush1.msra.mxu0 0.0
    %866 = vmatprep.subr.mxu0 0.0
    %867 = vmatpush1.msra.mxu0 0.0
    %868 = vmatprep.subr.mxu0 0.0
    %869 = vmatpush1.msra.mxu0 0.0
    %870 = vmatprep.subr.mxu0 0.0
    %871 = vmatpush1.msra.mxu0 0.0
    %872 = vmatprep.subr.mxu0 0.0
    %873 = vmatpush1.msra.mxu0 0.0
    %874 = vmatprep.subr.mxu0 0.0
    %875 = vmatpush1.msra.mxu0 0.0
    %876 = vmatprep.subr.mxu0 0.0
    %877 = vmatpush1.msra.mxu0 0.0
    %878 = vmatprep.subr.mxu0 0.0
    %879 = vmatpush1.msra.mxu0 0.0
    %880 = vmatprep.subr.mxu0 0.0
    %881 = vmatpush1.msra.mxu0 0.0
    %882 = vmatprep.subr.mxu0 0.0
    %883 = vmatpush1.msra.mxu0 0.0
    %884 = vmatprep.subr.mxu0 0.0
    %885 = vmatpush1.msra.mxu0 0.0
    %886 = vmatprep.subr.mxu0 0.0
    %887 = vmatpush1.msra.mxu0 0.0
    %888 = vmatprep.subr.mxu0 0.0
    %889 = vmatpush1.msra.mxu0 0.0
    %890 = vmatprep.subr.mxu0 0.0
    %891 = vmatpush1.msra.mxu0 0.0
    %892 = vmatprep.subr.mxu0 0.0
    %893 = vmatpush1.msra.mxu0 0.0
    %894 = vmatprep.subr.mxu0 0.0
    %895 = vmatpush1.msra.mxu0 0.0
    %896 = vmatprep.subr.mxu0 0.0
    %897 = vmatpush1.msra.mxu0 0.0
    %898 = vmatprep.subr.mxu0 0.0
    %899 = vmatpush1.msra.mxu0 0.0
    %900 = vmatprep.subr.mxu0 0.0
    %901 = vmatpush1.msra.mxu0 0.0
    %902 = vmatprep.subr.mxu0 0.0
    %903 = vmatpush1.msra.mxu0 0.0
    %904 = vmatprep.mubr.f32.mxu0 0.0
    %905 = vmatmul.mubr.f32.gmra.mrb[0].mxu0 %v115
    %v906 = vpop.f32.mrb[0].mxu0
    %v907 = vadd.f32 0.0, %v906
    %v908 = vpop.f32.mrb[0].mxu0
    %909 = vdwg.mxu0
    %v910 = vadd.f32 %v832, %v907
    %v911 = vtanh.pop %v910
    %v913 = vsel %vm113, %v911, 0
    %915 = vmatprep.subr.mxu0 0.0
    %916 = vmatpush1.msra.mxu0 %v750
    %917 = vmatprep.subr.mxu0 0.0
    %918 = vmatpush1.msra.mxu0 %v751
    %919 = vmatprep.subr.mxu0 0.0
    %920 = vmatpush1.msra.mxu0 %v752
    %921 = vmatprep.subr.mxu0 0.0
    %922 = vmatpush1.msra.mxu0 %v753
    %923 = vmatprep.subr.mxu0 0.0
    %924 = vmatpush1.msra.mxu0 0.0
    %925 = vmatprep.subr.mxu0 0.0
    %926 = vmatpush1.msra.mxu0 0.0
    %927 = vmatprep.subr.mxu0 0.0
    %928 = vmatpush1.msra.mxu0 0.0
    %929 = vmatprep.subr.mxu0 0.0
    %930 = vmatpush1.msra.mxu0 0.0
    %931 = vmatprep.subr.mxu0 0.0
    %932 = vmatpush1.msra.mxu0 0.0
    %933 = vmatprep.subr.mxu0 0.0
    %934 = vmatpush1.msra.mxu0 0.0
    %935 = vmatprep.subr.mxu0 0.0
    %936 = vmatpush1.msra.mxu0 0.0
    %937 = vmatprep.subr.mxu0 0.0
    %938 = vmatpush1.msra.mxu0 0.0
    %939 = vmatprep.subr.mxu0 0.0
    %940 = vmatpush1.msra.mxu0 0.0
    %941 = vmatprep.subr.mxu0 0.0
    %942 = vmatpush1.msra.mxu0 0.0
    %943 = vmatprep.subr.mxu0 0.0
    %944 = vmatpush1.msra.mxu0 0.0
    %945 = vmatprep.subr.mxu0 0.0
    %946 = vmatpush1.msra.mxu0 0.0
    %947 = vmatprep.subr.mxu0 0.0
    %948 = vmatpush1.msra.mxu0 0.0
    %949 = vmatprep.subr.mxu0 0.0
    %950 = vmatpush1.msra.mxu0 0.0
    %951 = vmatprep.subr.mxu0 0.0
    %952 = vmatpush1.msra.mxu0 0.0
    %953 = vmatprep.subr.mxu0 0.0
    %954 = vmatpush1.msra.mxu0 0.0
    %955 = vmatprep.subr.mxu0 0.0
    %956 = vmatpush1.msra.mxu0 0.0
    %957 = vmatprep.subr.mxu0 0.0
    %958 = vmatpush1.msra.mxu0 0.0
    %959 = vmatprep.subr.mxu0 0.0
    %960 = vmatpush1.msra.mxu0 0.0
    %961 = vmatprep.subr.mxu0 0.0
    %962 = vmatpush1.msra.mxu0 0.0
    %963 = vmatprep.subr.mxu0 0.0
    %964 = vmatpush1.msra.mxu0 0.0
    %965 = vmatprep.subr.mxu0 0.0
    %966 = vmatpush1.msra.mxu0 0.0
    %967 = vmatprep.subr.mxu0 0.0
    %968 = vmatpush1.msra.mxu0 0.0
    %969 = vmatprep.subr.mxu0 0.0
    %970 = vmatpush1.msra.mxu0 0.0
    %971 = vmatprep.subr.mxu0 0.0
    %972 = vmatpush1.msra.mxu0 0.0
    %973 = vmatprep.subr.mxu0 0.0
    %974 = vmatpush1.msra.mxu0 0.0
    %975 = vmatprep.subr.mxu0 0.0
    %976 = vmatpush1.msra.mxu0 0.0
    %977 = vmatprep.subr.mxu0 0.0
    %978 = vmatpush1.msra.mxu0 0.0
    %979 = vmatprep.mubr.f32.mxu0 0.0
    %980 = vmatmul.mubr.f32.gmra.mrb[0].mxu0 %v913
    %v981 = vpop.f32.mrb[0].mxu0
    %v982 = vadd.f32 0.0, %v981
    %v983 = vpop.f32.mrb[0].mxu0
    %984 = vdwg.mxu0
    %v986 = vrot.slane %v982, 6
    %v988 = vadd.f32 %v832, %v986
    %v989 = vtanh.pop %v988
    %v991 = vrot.slane %v989, 2
    %v992 = vsel %vm113, %v991, 0
    %994 = vmatprep.subr.mxu0 0.0
    %995 = vmatpush1.msra.mxu0 %v750
    %996 = vmatprep.subr.mxu0 0.0
    %997 = vmatpush1.msra.mxu0 %v751
    %998 = vmatprep.subr.mxu0 0.0
    %999 = vmatpush1.msra.mxu0 %v752
    %1000 = vmatprep.subr.mxu0 0.0
    %1001 = vmatpush1.msra.mxu0 %v753
    %1002 = vmatprep.subr.mxu0 0.0
    %1003 = vmatpush1.msra.mxu0 0.0
    %1004 = vmatprep.subr.mxu0 0.0
    %1005 = vmatpush1.msra.mxu0 0.0
    %1006 = vmatprep.subr.mxu0 0.0
    %1007 = vmatpush1.msra.mxu0 0.0
    %1008 = vmatprep.subr.mxu0 0.0
    %1009 = vmatpush1.msra.mxu0 0.0
    %1010 = vmatprep.subr.mxu0 0.0
    %1011 = vmatpush1.msra.mxu0 0.0
    %1012 = vmatprep.subr.mxu0 0.0
    %1013 = vmatpush1.msra.mxu0 0.0
    %1014 = vmatprep.subr.mxu0 0.0
    %1015 = vmatpush1.msra.mxu0 0.0
    %1016 = vmatprep.subr.mxu0 0.0
    %1017 = vmatpush1.msra.mxu0 0.0
    %1018 = vmatprep.subr.mxu0 0.0
    %1019 = vmatpush1.msra.mxu0 0.0
    %1020 = vmatprep.subr.mxu0 0.0
    %1021 = vmatpush1.msra.mxu0 0.0
    %1022 = vmatprep.subr.mxu0 0.0
    %1023 = vmatpush1.msra.mxu0 0.0
    %1024 = vmatprep.subr.mxu0 0.0
    %1025 = vmatpush1.msra.mxu0 0.0
    %1026 = vmatprep.subr.mxu0 0.0
    %1027 = vmatpush1.msra.mxu0 0.0
    %1028 = vmatprep.subr.mxu0 0.0
    %1029 = vmatpush1.msra.mxu0 0.0
    %1030 = vmatprep.subr.mxu0 0.0
    %1031 = vmatpush1.msra.mxu0 0.0
    %1032 = vmatprep.subr.mxu0 0.0
    %1033 = vmatpush1.msra.mxu0 0.0
    %1034 = vmatprep.subr.mxu0 0.0
    %1035 = vmatpush1.msra.mxu0 0.0
    %1036 = vmatprep.subr.mxu0 0.0
    %1037 = vmatpush1.msra.mxu0 0.0
    %1038 = vmatprep.subr.mxu0 0.0
    %1039 = vmatpush1.msra.mxu0 0.0
    %1040 = vmatprep.subr.mxu0 0.0
    %1041 = vmatpush1.msra.mxu0 0.0
    %1042 = vmatprep.subr.mxu0 0.0
    %1043 = vmatpush1.msra.mxu0 0.0
    %1044 = vmatprep.subr.mxu0 0.0
    %1045 = vmatpush1.msra.mxu0 0.0
    %1046 = vmatprep.subr.mxu0 0.0
    %1047 = vmatpush1.msra.mxu0 0.0
    %1048 = vmatprep.subr.mxu0 0.0
    %1049 = vmatpush1.msra.mxu0 0.0
    %1050 = vmatprep.subr.mxu0 0.0
    %1051 = vmatpush1.msra.mxu0 0.0
    %1052 = vmatprep.subr.mxu0 0.0
    %1053 = vmatpush1.msra.mxu0 0.0
    %1054 = vmatprep.subr.mxu0 0.0
    %1055 = vmatpush1.msra.mxu0 0.0
    %1056 = vmatprep.subr.mxu0 0.0
    %1057 = vmatpush1.msra.mxu0 0.0
    %1058 = vmatprep.mubr.f32.mxu0 0.0
    %1059 = vmatmul.mubr.f32.gmra.mrb[0].mxu0 %v992
    %v1060 = vpop.f32.mrb[0].mxu0
    %v1061 = vadd.f32 0.0, %v1060
    %v1062 = vpop.f32.mrb[0].mxu0
    %1063 = vdwg.mxu0
    %v1065 = vrot.slane %v1061, 4
    %v1067 = vadd.f32 %v832, %v1065
    %v1068 = vtanh.pop %v1067
    %v1070 = vrot.slane %v1068, 4
    %v1071 = vsel %vm113, %v1070, 0
    %1073 = vmatprep.subr.mxu0 0.0
    %1074 = vmatpush1.msra.mxu0 %v750
    %1075 = vmatprep.subr.mxu0 0.0
    %1076 = vmatpush1.msra.mxu0 %v751
    %1077 = vmatprep.subr.mxu0 0.0
    %1078 = vmatpush1.msra.mxu0 %v752
    %1079 = vmatprep.subr.mxu0 0.0
    %1080 = vmatpush1.msra.mxu0 %v753
    %1081 = vmatprep.subr.mxu0 0.0
    %1082 = vmatpush1.msra.mxu0 0.0
    %1083 = vmatprep.subr.mxu0 0.0
    %1084 = vmatpush1.msra.mxu0 0.0
    %1085 = vmatprep.subr.mxu0 0.0
    %1086 = vmatpush1.msra.mxu0 0.0
    %1087 = vmatprep.subr.mxu0 0.0
    %1088 = vmatpush1.msra.mxu0 0.0
    %1089 = vmatprep.subr.mxu0 0.0
    %1090 = vmatpush1.msra.mxu0 0.0
    %1091 = vmatprep.subr.mxu0 0.0
    %1092 = vmatpush1.msra.mxu0 0.0
    %1093 = vmatprep.subr.mxu0 0.0
    %1094 = vmatpush1.msra.mxu0 0.0
    %1095 = vmatprep.subr.mxu0 0.0
    %1096 = vmatpush1.msra.mxu0 0.0
    %1097 = vmatprep.subr.mxu0 0.0
    %1098 = vmatpush1.msra.mxu0 0.0
    %1099 = vmatprep.subr.mxu0 0.0
    %1100 = vmatpush1.msra.mxu0 0.0
    %1101 = vmatprep.subr.mxu0 0.0
    %1102 = vmatpush1.msra.mxu0 0.0
    %1103 = vmatprep.subr.mxu0 0.0
    %1104 = vmatpush1.msra.mxu0 0.0
    %1105 = vmatprep.subr.mxu0 0.0
    %1106 = vmatpush1.msra.mxu0 0.0
    %1107 = vmatprep.subr.mxu0 0.0
    %1108 = vmatpush1.msra.mxu0 0.0
    %1109 = vmatprep.subr.mxu0 0.0
    %1110 = vmatpush1.msra.mxu0 0.0
    %1111 = vmatprep.subr.mxu0 0.0
    %1112 = vmatpush1.msra.mxu0 0.0
    %1113 = vmatprep.subr.mxu0 0.0
    %1114 = vmatpush1.msra.mxu0 0.0
    %1115 = vmatprep.subr.mxu0 0.0
    %1116 = vmatpush1.msra.mxu0 0.0
    %1117 = vmatprep.subr.mxu0 0.0
    %1118 = vmatpush1.msra.mxu0 0.0
    %1119 = vmatprep.subr.mxu0 0.0
    %1120 = vmatpush1.msra.mxu0 0.0
    %1121 = vmatprep.subr.mxu0 0.0
    %1122 = vmatpush1.msra.mxu0 0.0
    %1123 = vmatprep.subr.mxu0 0.0
    %1124 = vmatpush1.msra.mxu0 0.0
    %1125 = vmatprep.subr.mxu0 0.0
    %1126 = vmatpush1.msra.mxu0 0.0
    %1127 = vmatprep.subr.mxu0 0.0
    %1128 = vmatpush1.msra.mxu0 0.0
    %1129 = vmatprep.subr.mxu0 0.0
    %1130 = vmatpush1.msra.mxu0 0.0
    %1131 = vmatprep.subr.mxu0 0.0
    %1132 = vmatpush1.msra.mxu0 0.0
    %1133 = vmatprep.subr.mxu0 0.0
    %1134 = vmatpush1.msra.mxu0 0.0
    %1135 = vmatprep.subr.mxu0 0.0
    %1136 = vmatpush1.msra.mxu0 0.0
    %1137 = vmatprep.mubr.f32.mxu0 0.0
    %1138 = vmatmul.mubr.f32.gmra.mrb[0].mxu0 %v1071
    %v1139 = vpop.f32.mrb[0].mxu0
    %v1140 = vadd.f32 0.0, %v1139
    %v1141 = vpop.f32.mrb[0].mxu0
    %1142 = vdwg.mxu0
    %v1144 = vrot.slane %v1140, 2
    %v1146 = vadd.f32 %v832, %v1144
    %v1147 = vtanh.pop %v1146
    %v1149 = vrot.slane %v1147, 6
    %v1150 = vsel %vm113, %v1149, 0
    %1152 = vmatprep.subr.mxu0 0.0
    %1153 = vmatpush1.msra.mxu0 %v750
    %1154 = vmatprep.subr.mxu0 0.0
    %1155 = vmatpush1.msra.mxu0 %v751
    %1156 = vmatprep.subr.mxu0 0.0
    %1157 = vmatpush1.msra.mxu0 %v752
    %1158 = vmatprep.subr.mxu0 0.0
    %1159 = vmatpush1.msra.mxu0 %v753
    %1160 = vmatprep.subr.mxu0 0.0
    %1161 = vmatpush1.msra.mxu0 0.0
    %1162 = vmatprep.subr.mxu0 0.0
    %1163 = vmatpush1.msra.mxu0 0.0
    %1164 = vmatprep.subr.mxu0 0.0
    %1165 = vmatpush1.msra.mxu0 0.0
    %1166 = vmatprep.subr.mxu0 0.0
    %1167 = vmatpush1.msra.mxu0 0.0
    %1168 = vmatprep.subr.mxu0 0.0
    %1169 = vmatpush1.msra.mxu0 0.0
    %1170 = vmatprep.subr.mxu0 0.0
    %1171 = vmatpush1.msra.mxu0 0.0
    %1172 = vmatprep.subr.mxu0 0.0
    %1173 = vmatpush1.msra.mxu0 0.0
    %1174 = vmatprep.subr.mxu0 0.0
    %1175 = vmatpush1.msra.mxu0 0.0
    %1176 = vmatprep.subr.mxu0 0.0
    %1177 = vmatpush1.msra.mxu0 0.0
    %1178 = vmatprep.subr.mxu0 0.0
    %1179 = vmatpush1.msra.mxu0 0.0
    %1180 = vmatprep.subr.mxu0 0.0
    %1181 = vmatpush1.msra.mxu0 0.0
    %1182 = vmatprep.subr.mxu0 0.0
    %1183 = vmatpush1.msra.mxu0 0.0
    %1184 = vmatprep.subr.mxu0 0.0
    %1185 = vmatpush1.msra.mxu0 0.0
    %1186 = vmatprep.subr.mxu0 0.0
    %1187 = vmatpush1.msra.mxu0 0.0
    %1188 = vmatprep.subr.mxu0 0.0
    %1189 = vmatpush1.msra.mxu0 0.0
    %1190 = vmatprep.subr.mxu0 0.0
    %1191 = vmatpush1.msra.mxu0 0.0
    %1192 = vmatprep.subr.mxu0 0.0
    %1193 = vmatpush1.msra.mxu0 0.0
    %1194 = vmatprep.subr.mxu0 0.0
    %1195 = vmatpush1.msra.mxu0 0.0
    %1196 = vmatprep.subr.mxu0 0.0
    %1197 = vmatpush1.msra.mxu0 0.0
    %1198 = vmatprep.subr.mxu0 0.0
    %1199 = vmatpush1.msra.mxu0 0.0
    %1200 = vmatprep.subr.mxu0 0.0
    %1201 = vmatpush1.msra.mxu0 0.0
    %1202 = vmatprep.subr.mxu0 0.0
    %1203 = vmatpush1.msra.mxu0 0.0
    %1204 = vmatprep.subr.mxu0 0.0
    %1205 = vmatpush1.msra.mxu0 0.0
    %1206 = vmatprep.subr.mxu0 0.0
    %1207 = vmatpush1.msra.mxu0 0.0
    %1208 = vmatprep.subr.mxu0 0.0
    %1209 = vmatpush1.msra.mxu0 0.0
    %1210 = vmatprep.subr.mxu0 0.0
    %1211 = vmatpush1.msra.mxu0 0.0
    %1212 = vmatprep.subr.mxu0 0.0
    %1213 = vmatpush1.msra.mxu0 0.0
    %1214 = vmatprep.subr.mxu0 0.0
    %1215 = vmatpush1.msra.mxu0 0.0
    %1216 = vmatprep.mubr.f32.mxu0 0.0
    %1217 = vmatmul.mubr.f32.gmra.mrb[0].mxu0 %v1150
    %v1218 = vpop.f32.mrb[0].mxu0
    %v1219 = vadd.f32 0.0, %v1218
    %v1220 = vpop.f32.mrb[0].mxu0
    %1221 = vdwg.mxu0
    %v1222 = vadd.f32 %v837, %v1219
    %v1223 = vtanh.pop %v1222
    %v1225 = vsel %vm113, %v1223, 0
    %1227 = vmatprep.subr.mxu0 0.0
    %1228 = vmatpush1.msra.mxu0 %v750
    %1229 = vmatprep.subr.mxu0 0.0
    %1230 = vmatpush1.msra.mxu0 %v751
    %1231 = vmatprep.subr.mxu0 0.0
    %1232 = vmatpush1.msra.mxu0 %v752
    %1233 = vmatprep.subr.mxu0 0.0
    %1234 = vmatpush1.msra.mxu0 %v753
    %1235 = vmatprep.subr.mxu0 0.0
    %1236 = vmatpush1.msra.mxu0 0.0
    %1237 = vmatprep.subr.mxu0 0.0
    %1238 = vmatpush1.msra.mxu0 0.0
    %1239 = vmatprep.subr.mxu0 0.0
    %1240 = vmatpush1.msra.mxu0 0.0
    %1241 = vmatprep.subr.mxu0 0.0
    %1242 = vmatpush1.msra.mxu0 0.0
    %1243 = vmatprep.subr.mxu0 0.0
    %1244 = vmatpush1.msra.mxu0 0.0
    %1245 = vmatprep.subr.mxu0 0.0
    %1246 = vmatpush1.msra.mxu0 0.0
    %1247 = vmatprep.subr.mxu0 0.0
    %1248 = vmatpush1.msra.mxu0 0.0
    %1249 = vmatprep.subr.mxu0 0.0
    %1250 = vmatpush1.msra.mxu0 0.0
    %1251 = vmatprep.subr.mxu0 0.0
    %1252 = vmatpush1.msra.mxu0 0.0
    %1253 = vmatprep.subr.mxu0 0.0
    %1254 = vmatpush1.msra.mxu0 0.0
    %1255 = vmatprep.subr.mxu0 0.0
    %1256 = vmatpush1.msra.mxu0 0.0
    %1257 = vmatprep.subr.mxu0 0.0
    %1258 = vmatpush1.msra.mxu0 0.0
    %1259 = vmatprep.subr.mxu0 0.0
    %1260 = vmatpush1.msra.mxu0 0.0
    %1261 = vmatprep.subr.mxu0 0.0
    %1262 = vmatpush1.msra.mxu0 0.0
    %1263 = vmatprep.subr.mxu0 0.0
    %1264 = vmatpush1.msra.mxu0 0.0
    %1265 = vmatprep.subr.mxu0 0.0
    %1266 = vmatpush1.msra.mxu0 0.0
    %1267 = vmatprep.subr.mxu0 0.0
    %1268 = vmatpush1.msra.mxu0 0.0
    %1269 = vmatprep.subr.mxu0 0.0
    %1270 = vmatpush1.msra.mxu0 0.0
    %1271 = vmatprep.subr.mxu0 0.0
    %1272 = vmatpush1.msra.mxu0 0.0
    %1273 = vmatprep.subr.mxu0 0.0
    %1274 = vmatpush1.msra.mxu0 0.0
    %1275 = vmatprep.subr.mxu0 0.0
    %1276 = vmatpush1.msra.mxu0 0.0
    %1277 = vmatprep.subr.mxu0 0.0
    %1278 = vmatpush1.msra.mxu0 0.0
    %1279 = vmatprep.subr.mxu0 0.0
    %1280 = vmatpush1.msra.mxu0 0.0
    %1281 = vmatprep.subr.mxu0 0.0
    %1282 = vmatpush1.msra.mxu0 0.0
    %1283 = vmatprep.subr.mxu0 0.0
    %1284 = vmatpush1.msra.mxu0 0.0
    %1285 = vmatprep.subr.mxu0 0.0
    %1286 = vmatpush1.msra.mxu0 0.0
    %1287 = vmatprep.subr.mxu0 0.0
    %1288 = vmatpush1.msra.mxu0 0.0
    %1289 = vmatprep.subr.mxu0 0.0
    %1290 = vmatpush1.msra.mxu0 0.0
    %1291 = vmatprep.mubr.f32.mxu0 0.0
    %1292 = vmatmul.mubr.f32.gmra.mrb[0].mxu0 %v1225
    %v1293 = vpop.f32.mrb[0].mxu0
    %v1294 = vadd.f32 0.0, %v1293
    %v1295 = vpop.f32.mrb[0].mxu0
    %1296 = vdwg.mxu0
    %v1298 = vrot.slane %v1294, 6
    %v1300 = vadd.f32 %v837, %v1298
    %v1301 = vtanh.pop %v1300
    %v1303 = vrot.slane %v1301, 2
    %v1304 = vsel %vm113, %v1303, 0
    %1306 = vmatprep.subr.mxu0 0.0
    %1307 = vmatpush1.msra.mxu0 %v750
    %1308 = vmatprep.subr.mxu0 0.0
    %1309 = vmatpush1.msra.mxu0 %v751
    %1310 = vmatprep.subr.mxu0 0.0
    %1311 = vmatpush1.msra.mxu0 %v752
    %1312 = vmatprep.subr.mxu0 0.0
    %1313 = vmatpush1.msra.mxu0 %v753
    %1314 = vmatprep.subr.mxu0 0.0
    %1315 = vmatpush1.msra.mxu0 0.0
    %1316 = vmatprep.subr.mxu0 0.0
    %1317 = vmatpush1.msra.mxu0 0.0
    %1318 = vmatprep.subr.mxu0 0.0
    %1319 = vmatpush1.msra.mxu0 0.0
    %1320 = vmatprep.subr.mxu0 0.0
    %1321 = vmatpush1.msra.mxu0 0.0
    %1322 = vmatprep.subr.mxu0 0.0
    %1323 = vmatpush1.msra.mxu0 0.0
    %1324 = vmatprep.subr.mxu0 0.0
    %1325 = vmatpush1.msra.mxu0 0.0
    %1326 = vmatprep.subr.mxu0 0.0
    %1327 = vmatpush1.msra.mxu0 0.0
    %1328 = vmatprep.subr.mxu0 0.0
    %1329 = vmatpush1.msra.mxu0 0.0
    %1330 = vmatprep.subr.mxu0 0.0
    %1331 = vmatpush1.msra.mxu0 0.0
    %1332 = vmatprep.subr.mxu0 0.0
    %1333 = vmatpush1.msra.mxu0 0.0
    %1334 = vmatprep.subr.mxu0 0.0
    %1335 = vmatpush1.msra.mxu0 0.0
    %1336 = vmatprep.subr.mxu0 0.0
    %1337 = vmatpush1.msra.mxu0 0.0
    %1338 = vmatprep.subr.mxu0 0.0
    %1339 = vmatpush1.msra.mxu0 0.0
    %1340 = vmatprep.subr.mxu0 0.0
    %1341 = vmatpush1.msra.mxu0 0.0
    %1342 = vmatprep.subr.mxu0 0.0
    %1343 = vmatpush1.msra.mxu0 0.0
    %1344 = vmatprep.subr.mxu0 0.0
    %1345 = vmatpush1.msra.mxu0 0.0
    %1346 = vmatprep.subr.mxu0 0.0
    %1347 = vmatpush1.msra.mxu0 0.0
    %1348 = vmatprep.subr.mxu0 0.0
    %1349 = vmatpush1.msra.mxu0 0.0
    %1350 = vmatprep.subr.mxu0 0.0
    %1351 = vmatpush1.msra.mxu0 0.0
    %1352 = vmatprep.subr.mxu0 0.0
    %1353 = vmatpush1.msra.mxu0 0.0
    %1354 = vmatprep.subr.mxu0 0.0
    %1355 = vmatpush1.msra.mxu0 0.0
    %1356 = vmatprep.subr.mxu0 0.0
    %1357 = vmatpush1.msra.mxu0 0.0
    %1358 = vmatprep.subr.mxu0 0.0
    %1359 = vmatpush1.msra.mxu0 0.0
    %1360 = vmatprep.subr.mxu0 0.0
    %1361 = vmatpush1.msra.mxu0 0.0
    %1362 = vmatprep.subr.mxu0 0.0
    %1363 = vmatpush1.msra.mxu0 0.0
    %1364 = vmatprep.subr.mxu0 0.0
    %1365 = vmatpush1.msra.mxu0 0.0
    %1366 = vmatprep.subr.mxu0 0.0
    %1367 = vmatpush1.msra.mxu0 0.0
    %1368 = vmatprep.subr.mxu0 0.0
    %1369 = vmatpush1.msra.mxu0 0.0
    %1370 = vmatprep.mubr.f32.mxu0 0.0
    %1371 = vmatmul.mubr.f32.gmra.mrb[0].mxu0 %v1304
    %v1372 = vpop.f32.mrb[0].mxu0
    %v1373 = vadd.f32 0.0, %v1372
    %v1374 = vpop.f32.mrb[0].mxu0
    %1375 = vdwg.mxu0
    %v1377 = vrot.slane %v1373, 4
    %v1379 = vadd.f32 %v837, %v1377
    %v1380 = vtanh.pop %v1379
    %v1382 = vrot.slane %v1380, 4
    %v1383 = vsel %vm113, %v1382, 0
    %1385 = vmatprep.subr.mxu0 0.0
    %1386 = vmatpush1.msra.mxu0 %v750
    %1387 = vmatprep.subr.mxu0 0.0
    %1388 = vmatpush1.msra.mxu0 %v751
    %1389 = vmatprep.subr.mxu0 0.0
    %1390 = vmatpush1.msra.mxu0 %v752
    %1391 = vmatprep.subr.mxu0 0.0
    %1392 = vmatpush1.msra.mxu0 %v753
    %1393 = vmatprep.subr.mxu0 0.0
    %1394 = vmatpush1.msra.mxu0 0.0
    %1395 = vmatprep.subr.mxu0 0.0
    %1396 = vmatpush1.msra.mxu0 0.0
    %1397 = vmatprep.subr.mxu0 0.0
    %1398 = vmatpush1.msra.mxu0 0.0
    %1399 = vmatprep.subr.mxu0 0.0
    %1400 = vmatpush1.msra.mxu0 0.0
    %1401 = vmatprep.subr.mxu0 0.0
    %1402 = vmatpush1.msra.mxu0 0.0
    %1403 = vmatprep.subr.mxu0 0.0
    %1404 = vmatpush1.msra.mxu0 0.0
    %1405 = vmatprep.subr.mxu0 0.0
    %1406 = vmatpush1.msra.mxu0 0.0
    %1407 = vmatprep.subr.mxu0 0.0
    %1408 = vmatpush1.msra.mxu0 0.0
    %1409 = vmatprep.subr.mxu0 0.0
    %1410 = vmatpush1.msra.mxu0 0.0
    %1411 = vmatprep.subr.mxu0 0.0
    %1412 = vmatpush1.msra.mxu0 0.0
    %1413 = vmatprep.subr.mxu0 0.0
    %1414 = vmatpush1.msra.mxu0 0.0
    %1415 = vmatprep.subr.mxu0 0.0
    %1416 = vmatpush1.msra.mxu0 0.0
    %1417 = vmatprep.subr.mxu0 0.0
    %1418 = vmatpush1.msra.mxu0 0.0
    %1419 = vmatprep.subr.mxu0 0.0
    %1420 = vmatpush1.msra.mxu0 0.0
    %1421 = vmatprep.subr.mxu0 0.0
    %1422 = vmatpush1.msra.mxu0 0.0
    %1423 = vmatprep.subr.mxu0 0.0
    %1424 = vmatpush1.msra.mxu0 0.0
    %1425 = vmatprep.subr.mxu0 0.0
    %1426 = vmatpush1.msra.mxu0 0.0
    %1427 = vmatprep.subr.mxu0 0.0
    %1428 = vmatpush1.msra.mxu0 0.0
    %1429 = vmatprep.subr.mxu0 0.0
    %1430 = vmatpush1.msra.mxu0 0.0
    %1431 = vmatprep.subr.mxu0 0.0
    %1432 = vmatpush1.msra.mxu0 0.0
    %1433 = vmatprep.subr.mxu0 0.0
    %1434 = vmatpush1.msra.mxu0 0.0
    %1435 = vmatprep.subr.mxu0 0.0
    %1436 = vmatpush1.msra.mxu0 0.0
    %1437 = vmatprep.subr.mxu0 0.0
    %1438 = vmatpush1.msra.mxu0 0.0
    %1439 = vmatprep.subr.mxu0 0.0
    %1440 = vmatpush1.msra.mxu0 0.0
    %1441 = vmatprep.subr.mxu0 0.0
    %1442 = vmatpush1.msra.mxu0 0.0
    %1443 = vmatprep.subr.mxu0 0.0
    %1444 = vmatpush1.msra.mxu0 0.0
    %1445 = vmatprep.subr.mxu0 0.0
    %1446 = vmatpush1.msra.mxu0 0.0
    %1447 = vmatprep.subr.mxu0 0.0
    %1448 = vmatpush1.msra.mxu0 0.0
    %1449 = vmatprep.mubr.f32.mxu0 0.0
    %1450 = vmatmul.mubr.f32.gmra.mrb[0].mxu0 %v1383
    %v1451 = vpop.f32.mrb[0].mxu0
    %v1452 = vadd.f32 0.0, %v1451
    %v1453 = vpop.f32.mrb[0].mxu0
    %1454 = vdwg.mxu0
    %v1456 = vrot.slane %v1452, 2
    %v1458 = vadd.f32 %v837, %v1456
    %v1459 = vtanh.pop %v1458
    %v1460 = vld [vmem:[%s3] sm:$0xff]
    %v1461 = vld [vmem:[%s3 + $0x8] sm:$0xff]
    %v1462 = vld [vmem:[%s3 + $0x10] sm:$0xff]
    %v1463 = vld [vmem:[%s3 + $0x18] sm:$0xff]
    %v1464 = vld [vmem:[%s3 + $0x20] sm:$0x1]
    %v1465 = vlaneseq
    %v1466 = vshrl.u32 %v1465, 7
    %v1467 = vsub.s32 0, %v1466
    %v1468 = vrot.slane %v1464, %v1467
    %v1470 = vrot.slane %v1459, 6
    %v1471 = vsel %vm113, %v1470, 0
    %1473 = vmatprep.subr.mxu0 0.0
    %1474 = vmatpush1.msra.mxu0 %v1460
    %1475 = vmatprep.subr.mxu0 0.0
    %1476 = vmatpush1.msra.mxu0 %v1461
    %1477 = vmatprep.subr.mxu0 0.0
    %1478 = vmatpush1.msra.mxu0 %v1462
    %1479 = vmatprep.subr.mxu0 0.0
    %1480 = vmatpush1.msra.mxu0 %v1463
    %1481 = vmatprep.subr.mxu0 0.0
    %1482 = vmatpush1.msra.mxu0 0.0
    %1483 = vmatprep.subr.mxu0 0.0
    %1484 = vmatpush1.msra.mxu0 0.0
    %1485 = vmatprep.subr.mxu0 0.0
    %1486 = vmatpush1.msra.mxu0 0.0
    %1487 = vmatprep.subr.mxu0 0.0
    %1488 = vmatpush1.msra.mxu0 0.0
    %1489 = vmatprep.subr.mxu0 0.0
    %1490 = vmatpush1.msra.mxu0 0.0
    %1491 = vmatprep.subr.mxu0 0.0
    %1492 = vmatpush1.msra.mxu0 0.0
    %1493 = vmatprep.subr.mxu0 0.0
    %1494 = vmatpush1.msra.mxu0 0.0
    %1495 = vmatprep.subr.mxu0 0.0
    %1496 = vmatpush1.msra.mxu0 0.0
    %1497 = vmatprep.subr.mxu0 0.0
    %1498 = vmatpush1.msra.mxu0 0.0
    %1499 = vmatprep.subr.mxu0 0.0
    %1500 = vmatpush1.msra.mxu0 0.0
    %1501 = vmatprep.subr.mxu0 0.0
    %1502 = vmatpush1.msra.mxu0 0.0
    %1503 = vmatprep.subr.mxu0 0.0
    %1504 = vmatpush1.msra.mxu0 0.0
    %1505 = vmatprep.subr.mxu0 0.0
    %1506 = vmatpush1.msra.mxu0 0.0
    %1507 = vmatprep.subr.mxu0 0.0
    %1508 = vmatpush1.msra.mxu0 0.0
    %1509 = vmatprep.subr.mxu0 0.0
    %1510 = vmatpush1.msra.mxu0 0.0
    %1511 = vmatprep.subr.mxu0 0.0
    %1512 = vmatpush1.msra.mxu0 0.0
    %1513 = vmatprep.subr.mxu0 0.0
    %1514 = vmatpush1.msra.mxu0 0.0
    %1515 = vmatprep.subr.mxu0 0.0
    %1516 = vmatpush1.msra.mxu0 0.0
    %1517 = vmatprep.subr.mxu0 0.0
    %1518 = vmatpush1.msra.mxu0 0.0
    %1519 = vmatprep.subr.mxu0 0.0
    %1520 = vmatpush1.msra.mxu0 0.0
    %1521 = vmatprep.subr.mxu0 0.0
    %1522 = vmatpush1.msra.mxu0 0.0
    %1523 = vmatprep.subr.mxu0 0.0
    %1524 = vmatpush1.msra.mxu0 0.0
    %1525 = vmatprep.subr.mxu0 0.0
    %1526 = vmatpush1.msra.mxu0 0.0
    %1527 = vmatprep.subr.mxu0 0.0
    %1528 = vmatpush1.msra.mxu0 0.0
    %1529 = vmatprep.subr.mxu0 0.0
    %1530 = vmatpush1.msra.mxu0 0.0
    %1531 = vmatprep.subr.mxu0 0.0
    %1532 = vmatpush1.msra.mxu0 0.0
    %1533 = vmatprep.subr.mxu0 0.0
    %1534 = vmatpush1.msra.mxu0 0.0
    %1535 = vmatprep.subr.mxu0 0.0
    %1536 = vmatpush1.msra.mxu0 0.0
    %1537 = vmatprep.mubr.f32.mxu0 0.0
    %1538 = vmatmul.mubr.f32.gmra.mrb[0].mxu0 %v1471
    %v1539 = vpop.f32.mrb[0].mxu0
    %v1540 = vadd.f32 %v1468, %v1539
    %v1541 = vpop.f32.mrb[0].mxu0
    %1542 = vdwg.mxu0
    %vm1543 = vcmask 25600
    %1544 = vst.msk [vmem:[#allocation2] sm:$0x3] %vm1543, %v1540
    // Predicated region
    $region18: #{tpu_custom_call.1} parent=1 // pred_check
      _
    $region19: #{tpu_custom_call.1} parent=1 // pred_check_branch
      %1546 = sbr.rel (0) target = $region21
    $region20: #{tpu_custom_call.1} parent=1 // pred_region
      %s1548 = ssub.s32 32, 32
      %1549 = vsyncadd [#allocation3], %s1548
      %s1551 = sshll.u32 [#allocation2], 4
      %s1552 = int_to_ptr.vmem [resolvable:$true] %s1551
      %1554 = dma.vmem_to_hbm [thread:$0]  %s1552, 32, %s4, [#allocation3]
    $region21: #{tpu_custom_call.1} parent=1 // pred_fallthru
      _
    // Predicated region
    $region22: #{tpu_custom_call.1} parent=1 // pred_check
      _
    $region23: #{tpu_custom_call.1} parent=1 // pred_check_branch
      %1556 = sbr.rel (0) target = $region25
    $region24: #{tpu_custom_call.1} parent=1 // pred_region
      %1557 = dma.done [#allocation3], 32
    $region25: #{tpu_custom_call.1} parent=1 // pred_fallthru
      _
    %1558 = vsyncpa [#allocation3], 1

</llo_original>
